<compile_context>
chip_gen: v7x
topology: tpu7x:2x2x1
jax: 0.10.0
libtpu: 0.0.40
codegen_flags: <defaults>
</compile_context>

<pallas_src>
import jax
import jax.numpy as jnp
from jax.experimental import pallas as pl
from jax.experimental.pallas import tpu as pltpu

_VMEM_LIMIT_BYTES = 48 * 1024 * 1024  # > 16/32 MiB scoped defaults, < v7x 64 MiB physical


def _pad128(x):
    return ((x + 127) // 128) * 128


# ----------------------------------------------------------------------------
# In-kernel helpers (traced inside the Pallas kernel; all math in f32)
# ----------------------------------------------------------------------------
def _batch_norm_train(x, gamma, beta, eps=1e-5):
    """nn.BatchNorm1d forward in training mode (batch statistics over all nodes)."""
    # TODO(synk): eval-mode BN with running statistics would be a pure affine map;
    # a freshly constructed PyTorch module runs in train mode, so use batch stats.
    mu = jnp.mean(x, axis=0, keepdims=True)
    var = jnp.mean(jnp.square(x - mu), axis=0, keepdims=True)
    return gamma * (x - mu) * jax.lax.rsqrt(var + eps) + beta


def _activation(x, activ):
    if activ == "relu":
        return jnp.maximum(x, 0.0)
    if activ == "sigmoid":
        return jax.nn.sigmoid(x)
    return x  # PyTorch code falls through with no activation otherwise


# ----------------------------------------------------------------------------
# Fused GIN forward kernel (single pallas_call for the whole network)
# ----------------------------------------------------------------------------
def _make_gin_kernel(n_gin, n_mlp, activ, in_pad, hid_pad):
    # Static slab offsets -- must match the packing order used in init_params.
    layer_meta = []
    w_off = 0
    v_off = 0
    for i in range(n_gin):
        d = in_pad if i == 0 else hid_pad
        hidden_lins = []
        for _ in range(n_mlp - 1):
            hidden_lins.append((w_off, d))
            w_off += d
            d = hid_pad
        last_lin = (w_off, d)
        w_off += d
        layer_meta.append((hidden_lins, last_lin, v_off))
        v_off += 3 * (n_mlp - 1) + 5

    def kernel(eps_ref, a_ref, h0_ref, w_ref, v_ref, wh_ref, bh_ref,
               out_ref, hcat_ref):
        a = a_ref[...]            # bf16 [N, N]   (0/1, or 1/deg for mean pooling)
        h = h0_ref[...]           # bf16 [N, in_pad]

        for i, (hidden_lins, last_lin, v0) in enumerate(layer_meta):
            # --- GINConv: (1 + eps_i) * h + neighbor aggregation A @ h (bf16 in, f32 acc)
            agg = (1.0 + eps_ref[i]) * h.astype(jnp.float32)
            agg = agg + jnp.dot(a, h, preferred_element_type=jnp.float32)

            # --- MLP: (n_mlp-1) x [Linear -> BN -> activation], then a linear output
            t = agg
            r = v0
            for (woff, k) in hidden_lins:
                w = w_ref[pl.ds(woff, k), :]
                b = v_ref[pl.ds(r, 1), :]
                g = v_ref[pl.ds(r + 1, 1), :]
                be = v_ref[pl.ds(r + 2, 1), :]
                r += 3
                t = jnp.dot(t.astype(jnp.bfloat16), w,
                            preferred_element_type=jnp.float32) + b
                t = _batch_norm_train(t, g, be)
                t = _activation(t, activ)

            woff, k = last_lin
            w_last = w_ref[pl.ds(woff, k), :]
            b_last = v_ref[pl.ds(r, 1), :]
            g_ap = v_ref[pl.ds(r + 1, 1), :]
            be_ap = v_ref[pl.ds(r + 2, 1), :]
            g_gn = v_ref[pl.ds(r + 3, 1), :]
            be_gn = v_ref[pl.ds(r + 4, 1), :]
            t = jnp.dot(t.astype(jnp.bfloat16), w_last,
                        preferred_element_type=jnp.float32) + b_last

            # --- ApplyNodeFunc: BN + hard-coded sigmoid
            t = _batch_norm_train(t, g_ap, be_ap)
            t = jax.nn.sigmoid(t)
            # --- GIN.forward: BN + outer activation
            t = _batch_norm_train(t, g_gn, be_gn)
            t = _activation(t, activ)

            h = t.astype(jnp.bfloat16)
            # lane-concatenation into the head scratch (replaces torch.cat(ll, -1))
            hcat_ref[:, i * hid_pad:(i + 1) * hid_pad] = h

        # --- linearcomp head: single well-shaped matmul, lane-dense padded output
        out_ref[...] = (jnp.dot(hcat_ref[...], wh_ref[...],
                                preferred_element_type=jnp.float32)
                        + bh_ref[...]).astype(out_ref.dtype)

    return kernel


# ----------------------------------------------------------------------------
# Host-side wrapper
# ----------------------------------------------------------------------------
def gin_forward(adj, feats, params, *, num_layers, num_mlp_layers, activation,
                neighbor_pooling_type="sum"):
    n_gin = num_layers - 1
    n = feats.shape[0]
    input_dim, hidden_dim, output_dim, in_pad, hid_pad, out_pad = params["dims"]

    a = adj.astype(jnp.float32)
    if neighbor_pooling_type == "mean":
        deg = jnp.maximum(a.sum(axis=1, keepdims=True), 1.0)
        a = a / deg
    elif neighbor_pooling_type != "sum":
        # TODO(synk): 'max' neighbor pooling has no dense-matmul form; only sum/mean.
        raise NotImplementedError(neighbor_pooling_type)

    a_bf = a.astype(jnp.bfloat16)       # 0/1 adjacency -> exact in bf16 for sum pooling
    h0 = jnp.pad(feats.astype(jnp.float32),
                 ((0, 0), (0, in_pad - input_dim))).astype(jnp.bfloat16)

    # Rough VMEM estimate (inputs double-buffered by the runtime) + scratch.
    vmem_est = 2 * (a_bf.size * 2 + h0.size * 2 + params["w_slab"].size * 2 +
                    params["v_slab"].size * 4 + params["w_head"].size * 2 +
                    params["b_head"].size * 4 + n * out_pad * 4) \
        + n * n_gin * hid_pad * 2
    assert vmem_est < _VMEM_LIMIT_BYTES, (
        f"graph too large for fused single-block path (~{vmem_est/2**20:.1f} MiB VMEM); "
        "a row-tiled grid (with global BN statistics) is required")

    # Advisory cost estimate for the XLA scheduler.
    flops = 0
    d = in_pad
    for _ in range(n_gin):
        flops += 2 * n * n * d                      # A @ h
        dd = d
        for _ in range(num_mlp_layers - 1):
            flops += 2 * n * dd * hid_pad
            dd = hid_pad
        flops += 2 * n * dd * hid_pad               # MLP output linear
        d = hid_pad
    flops += 2 * n * (n_gin * hid_pad) * out_pad    # head
    trans = n_gin * n * hid_pad                     # ApplyNodeFunc sigmoid
    if activation == "sigmoid":
        trans += n_gin * n * hid_pad * num_mlp_layers
    bytes_acc = (a_bf.size * 2 + h0.size * 2 + params["w_slab"].size * 2 +
                 params["v_slab"].size * 4 + params["w_head"].size * 2 +
                 params["b_head"].size * 4 + n * out_pad * 4)

    smem = pl.BlockSpec(memory_space=pltpu.MemorySpace.SMEM)
    vmem = pl.BlockSpec(memory_space=pltpu.MemorySpace.VMEM)

    out_padded = pl.pallas_call(
        _make_gin_kernel(n_gin, num_mlp_layers, activation, in_pad, hid_pad),
        out_shape=jax.ShapeDtypeStruct((n, out_pad), jnp.float32),
        in_specs=[smem] + [vmem] * 6,
        out_specs=vmem,
        scratch_shapes=[pltpu.VMEM((n, n_gin * hid_pad), jnp.bfloat16)],
        compiler_params=pltpu.CompilerParams(vmem_limit_bytes=_VMEM_LIMIT_BYTES),
        cost_estimate=pl.CostEstimate(flops=int(flops),
                                      transcendentals=int(trans),
                                      bytes_accessed=int(bytes_acc)),
    )(params["eps"], a_bf, h0, params["w_slab"], params["v_slab"],
      params["w_head"], params["b_head"])

    # Un-pad the lane-dense output back to the true number of classes.
    return out_padded[:, :output_dim]


def init_params(key, input_dim, hidden_dim, output_dim, num_layers, num_mlp_layers):
    """PyTorch-default-style init; weights pre-transposed to [F_in, F_out], all
    feature dims zero-padded to 128 lanes, params packed into slabs."""
    n_gin = num_layers - 1
    in_pad, hid_pad, out_pad = _pad128(input_dim), _pad128(hidden_dim), _pad128(output_dim)

    def linear_init(k, fan_in, fan_out):
        kw, kb = jax.random.split(k)
        bound = float(fan_in) ** -0.5
        w = jax.random.uniform(kw, (fan_in, fan_out), jnp.float32, -bound, bound)
        b = jax.random.uniform(kb, (1, fan_out), jnp.float32, -bound, bound)
        return w, b

    # BN gamma=1 / beta=0 on real lanes, 0 on padded lanes (keeps padding inert).
    gamma_row = jnp.pad(jnp.ones((1, hidden_dim), jnp.float32),
                        ((0, 0), (0, hid_pad - hidden_dim)))
    beta_row = jnp.zeros((1, hid_pad), jnp.float32)

    w_rows, v_rows = [], []
    for i in range(n_gin):
        d, d_pad = (input_dim, in_pad) if i == 0 else (hidden_dim, hid_pad)
        for _ in range(num_mlp_layers - 1):
            key, k = jax.random.split(key)
            w, b = linear_init(k, d, hidden_dim)
            w_rows.append(jnp.pad(w, ((0, d_pad - d), (0, hid_pad - hidden_dim))))
            v_rows.append(jnp.pad(b, ((0, 0), (0, hid_pad - hidden_dim))))
            v_rows.append(gamma_row)                 # MLP BatchNorm1d gamma
            v_rows.append(beta_row)                  # MLP BatchNorm1d beta
            d, d_pad = hidden_dim, hid_pad
        key, k = jax.random.split(key)
        w, b = linear_init(k, d, hidden_dim)         # MLP output linear (no BN/activ)
        w_rows.append(jnp.pad(w, ((0, d_pad - d), (0, hid_pad - hidden_dim))))
        v_rows.append(jnp.pad(b, ((0, 0), (0, hid_pad - hidden_dim))))
        v_rows.append(gamma_row)                     # ApplyNodeFunc BatchNorm1d
        v_rows.append(beta_row)
        v_rows.append(gamma_row)                     # GIN-level BatchNorm1d
        v_rows.append(beta_row)

    w_slab = jnp.concatenate(w_rows, axis=0).astype(jnp.bfloat16)
    v_slab = jnp.concatenate(v_rows, axis=0)         # f32

    # linearcomp: Linear((num_layers-1)*hidden_dim, output_dim), scattered into
    # padded per-layer row blocks so it consumes the lane-concatenated scratch.
    key, k = jax.random.split(key)
    w_head, b_head = linear_init(k, n_gin * hidden_dim, output_dim)
    w_head_pad = jnp.zeros((n_gin * hid_pad, out_pad), jnp.float32)
    for i in range(n_gin):
        w_head_pad = w_head_pad.at[i * hid_pad:i * hid_pad + hidden_dim, :output_dim].set(
            w_head[i * hidden_dim:(i + 1) * hidden_dim, :])
    w_head_pad = w_head_pad.astype(jnp.bfloat16)
    b_head_pad = jnp.pad(b_head, ((0, 0), (0, out_pad - output_dim)))

    eps = jnp.zeros((n_gin,), jnp.float32)           # GINConv learnable eps, init 0

    return {"eps": eps, "w_slab": w_slab, "v_slab": v_slab,
            "w_head": w_head_pad, "b_head": b_head_pad,
            "dims": (input_dim, hidden_dim, output_dim, in_pad, hid_pad, out_pad)}


# ----------------------------------------------------------------------------
# Demo: a batch of small graphs packed block-diagonally into one launch
# ----------------------------------------------------------------------------
if __name__ == "__main__":
    N_GRAPHS = 4
    NODES_PER_GRAPH = 8
    N_NODES = N_GRAPHS * NODES_PER_GRAPH       # 32 nodes total in one launch
    INPUT_DIM = 16
    HIDDEN_DIM = 32
    OUTPUT_DIM = 4
    NUM_LAYERS = 3        # -> num_layers - 1 = 2 GINConv layers, like GIN.forward
    NUM_MLP_LAYERS = 2
    ACTIVATION = "relu"   # GIN/MLP-level activation ('sigmoid' also supported)

    key = jax.random.PRNGKey(0)
    k_feat, k_adj, k_param = jax.random.split(key, 3)

    features = jax.random.normal(k_feat, (N_NODES, INPUT_DIM), jnp.float32)

    # Random undirected graphs, no self loops (GINConv handles the center node via
    # (1+eps)*h), batched block-diagonally -- identical to DGL graph batching.
    graph_ids = jnp.repeat(jnp.arange(N_GRAPHS), NODES_PER_GRAPH)
    block_mask = (graph_ids[:, None] == graph_ids[None, :]).astype(jnp.float32)
    raw = (jax.random.uniform(k_adj, (N_NODES, N_NODES)) > 0.5).astype(jnp.float32)
    adj = jnp.clip(raw + raw.T, 0.0, 1.0) * block_mask
    adj = adj * (1.0 - jnp.eye(N_NODES, dtype=jnp.float32))

    params = init_params(k_param, INPUT_DIM, HIDDEN_DIM, OUTPUT_DIM,
                         NUM_LAYERS, NUM_MLP_LAYERS)

    out = gin_forward(adj, features, params,
                      num_layers=NUM_LAYERS,
                      num_mlp_layers=NUM_MLP_LAYERS,
                      activation=ACTIVATION,
                      neighbor_pooling_type="sum")
    out = jax.block_until_ready(out)

    assert out.shape == (N_NODES, OUTPUT_DIM), out.shape
    assert bool(jnp.all(jnp.isfinite(out)))
    print("KERNEL_OK")
</pallas_src>

<mosaic_0001>
module attributes {stable_mosaic.version = 11 : i64} {
  func.func @kernel(%arg0: memref<2xf32, #tpu.memory_space<smem>>, %arg1: memref<32x32xbf16, #tpu.memory_space<vmem>>, %arg2: memref<32x128xbf16, #tpu.memory_space<vmem>>, %arg3: memref<512x128xbf16, #tpu.memory_space<vmem>>, %arg4: memref<16x128xf32, #tpu.memory_space<vmem>>, %arg5: memref<256x128xbf16, #tpu.memory_space<vmem>>, %arg6: memref<1x128xf32, #tpu.memory_space<vmem>>, %arg7: memref<32x128xf32, #tpu.memory_space<vmem>>, %arg8: memref<32x256xbf16, #tpu.memory_space<vmem>>) attributes {dimension_semantics = [], scalar_prefetch = 0 : i64, scratch_operands = 1 : i64, tpu.core_type = #tpu.core_type<tc>} {
    %c0 = arith.constant 0 : index
    %c0_0 = arith.constant 0 : index
    %0 = vector.load %arg1[%c0, %c0_0] : memref<32x32xbf16, #tpu.memory_space<vmem>>, vector<32x32xbf16>
    %c0_1 = arith.constant 0 : index
    %c0_2 = arith.constant 0 : index
    %1 = vector.load %arg2[%c0_1, %c0_2] : memref<32x128xbf16, #tpu.memory_space<vmem>>, vector<32x128xbf16>
    %c0_3 = arith.constant 0 : index
    %2 = memref.load %arg0[%c0_3] : memref<2xf32, #tpu.memory_space<smem>>
    %cst = arith.constant 1.000000e+00 : f32
    %3 = arith.addf %cst, %2 : f32
    %4 = arith.extf %1 : vector<32x128xbf16> to vector<32x128xf32>
    %5 = vector.broadcast %3 : f32 to vector<32x128xf32>
    %6 = arith.mulf %5, %4 : vector<32x128xf32>
    %cst_4 = arith.constant dense<0.000000e+00> : vector<32x128xf32>
    %7 = tpu.matmul %0, %1, %cst_4 {dimension_numbers = #tpu.dot_dimension_numbers<[1], [0], [0], [1], [0, 0, 1, 1], [], []>} : vector<32x32xbf16>, vector<32x128xbf16>, vector<32x128xf32> -> vector<32x128xf32>
    %8 = arith.addf %6, %7 : vector<32x128xf32>
    %c0_5 = arith.constant 0 : index
    %c0_6 = arith.constant 0 : index
    %9 = vector.load %arg3[%c0_5, %c0_6] : memref<512x128xbf16, #tpu.memory_space<vmem>>, vector<128x128xbf16>
    %c0_7 = arith.constant 0 : index
    %c0_8 = arith.constant 0 : index
    %10 = vector.load %arg4[%c0_7, %c0_8] : memref<16x128xf32, #tpu.memory_space<vmem>>, vector<1x128xf32>
    %c1 = arith.constant 1 : index
    %c0_9 = arith.constant 0 : index
    %11 = vector.load %arg4[%c1, %c0_9] : memref<16x128xf32, #tpu.memory_space<vmem>>, vector<1x128xf32>
    %c2 = arith.constant 2 : index
    %c0_10 = arith.constant 0 : index
    %12 = vector.load %arg4[%c2, %c0_10] : memref<16x128xf32, #tpu.memory_space<vmem>>, vector<1x128xf32>
    %13 = arith.truncf %8 : vector<32x128xf32> to vector<32x128xbf16>
    %cst_11 = arith.constant dense<0.000000e+00> : vector<32x128xf32>
    %14 = tpu.matmul %13, %9, %cst_11 {dimension_numbers = #tpu.dot_dimension_numbers<[1], [0], [0], [1], [0, 0, 1, 1], [], []>} : vector<32x128xbf16>, vector<128x128xbf16>, vector<32x128xf32> -> vector<32x128xf32>
    %15 = vector.broadcast %10 : vector<1x128xf32> to vector<32x128xf32>
    %16 = arith.addf %14, %15 : vector<32x128xf32>
    %cst_12 = arith.constant dense<0.000000e+00> : vector<128xf32>
    %17 = vector.multi_reduction <add>, %16, %cst_12 [0] : vector<32x128xf32> to vector<128xf32>
    %18 = vector.shape_cast %17 : vector<128xf32> to vector<1x128xf32>
    %cst_13 = arith.constant 3.200000e+01 : f32
    %19 = vector.broadcast %cst_13 : f32 to vector<1x128xf32>
    %20 = arith.divf %18, %19 : vector<1x128xf32>
    %21 = vector.broadcast %20 : vector<1x128xf32> to vector<32x128xf32>
    %22 = arith.subf %16, %21 : vector<32x128xf32>
    %23 = arith.mulf %22, %22 : vector<32x128xf32>
    %cst_14 = arith.constant dense<0.000000e+00> : vector<128xf32>
    %24 = vector.multi_reduction <add>, %23, %cst_14 [0] : vector<32x128xf32> to vector<128xf32>
    %25 = vector.shape_cast %24 : vector<128xf32> to vector<1x128xf32>
    %cst_15 = arith.constant 3.200000e+01 : f32
    %26 = vector.broadcast %cst_15 : f32 to vector<1x128xf32>
    %27 = arith.divf %25, %26 : vector<1x128xf32>
    %28 = vector.broadcast %20 : vector<1x128xf32> to vector<32x128xf32>
    %29 = arith.subf %16, %28 : vector<32x128xf32>
    %30 = vector.broadcast %11 : vector<1x128xf32> to vector<32x128xf32>
    %31 = arith.mulf %30, %29 : vector<32x128xf32>
    %cst_16 = arith.constant 9.99999974E-6 : f32
    %32 = vector.broadcast %cst_16 : f32 to vector<1x128xf32>
    %33 = arith.addf %27, %32 : vector<1x128xf32>
    %34 = math.rsqrt %33 : vector<1x128xf32>
    %35 = vector.broadcast %34 : vector<1x128xf32> to vector<32x128xf32>
    %36 = arith.mulf %31, %35 : vector<32x128xf32>
    %37 = vector.broadcast %12 : vector<1x128xf32> to vector<32x128xf32>
    %38 = arith.addf %36, %37 : vector<32x128xf32>
    %cst_17 = arith.constant 0.000000e+00 : f32
    %39 = vector.broadcast %cst_17 : f32 to vector<32x128xf32>
    %40 = arith.maximumf %38, %39 : vector<32x128xf32>
    %c128 = arith.constant 128 : index
    %c0_18 = arith.constant 0 : index
    %41 = vector.load %arg3[%c128, %c0_18] : memref<512x128xbf16, #tpu.memory_space<vmem>>, vector<128x128xbf16>
    %c3 = arith.constant 3 : index
    %c0_19 = arith.constant 0 : index
    %42 = vector.load %arg4[%c3, %c0_19] : memref<16x128xf32, #tpu.memory_space<vmem>>, vector<1x128xf32>
    %c4 = arith.constant 4 : index
    %c0_20 = arith.constant 0 : index
    %43 = vector.load %arg4[%c4, %c0_20] : memref<16x128xf32, #tpu.memory_space<vmem>>, vector<1x128xf32>
    %c5 = arith.constant 5 : index
    %c0_21 = arith.constant 0 : index
    %44 = vector.load %arg4[%c5, %c0_21] : memref<16x128xf32, #tpu.memory_space<vmem>>, vector<1x128xf32>
    %c6 = arith.constant 6 : index
    %c0_22 = arith.constant 0 : index
    %45 = vector.load %arg4[%c6, %c0_22] : memref<16x128xf32, #tpu.memory_space<vmem>>, vector<1x128xf32>
    %c7 = arith.constant 7 : index
    %c0_23 = arith.constant 0 : index
    %46 = vector.load %arg4[%c7, %c0_23] : memref<16x128xf32, #tpu.memory_space<vmem>>, vector<1x128xf32>
    %47 = arith.truncf %40 : vector<32x128xf32> to vector<32x128xbf16>
    %cst_24 = arith.constant dense<0.000000e+00> : vector<32x128xf32>
    %48 = tpu.matmul %47, %41, %cst_24 {dimension_numbers = #tpu.dot_dimension_numbers<[1], [0], [0], [1], [0, 0, 1, 1], [], []>} : vector<32x128xbf16>, vector<128x128xbf16>, vector<32x128xf32> -> vector<32x128xf32>
    %49 = vector.broadcast %42 : vector<1x128xf32> to vector<32x128xf32>
    %50 = arith.addf %48, %49 : vector<32x128xf32>
    %cst_25 = arith.constant dense<0.000000e+00> : vector<128xf32>
    %51 = vector.multi_reduction <add>, %50, %cst_25 [0] : vector<32x128xf32> to vector<128xf32>
    %52 = vector.shape_cast %51 : vector<128xf32> to vector<1x128xf32>
    %cst_26 = arith.constant 3.200000e+01 : f32
    %53 = vector.broadcast %cst_26 : f32 to vector<1x128xf32>
    %54 = arith.divf %52, %53 : vector<1x128xf32>
    %55 = vector.broadcast %54 : vector<1x128xf32> to vector<32x128xf32>
    %56 = arith.subf %50, %55 : vector<32x128xf32>
    %57 = arith.mulf %56, %56 : vector<32x128xf32>
    %cst_27 = arith.constant dense<0.000000e+00> : vector<128xf32>
    %58 = vector.multi_reduction <add>, %57, %cst_27 [0] : vector<32x128xf32> to vector<128xf32>
    %59 = vector.shape_cast %58 : vector<128xf32> to vector<1x128xf32>
    %cst_28 = arith.constant 3.200000e+01 : f32
    %60 = vector.broadcast %cst_28 : f32 to vector<1x128xf32>
    %61 = arith.divf %59, %60 : vector<1x128xf32>
    %62 = vector.broadcast %54 : vector<1x128xf32> to vector<32x128xf32>
    %63 = arith.subf %50, %62 : vector<32x128xf32>
    %64 = vector.broadcast %43 : vector<1x128xf32> to vector<32x128xf32>
    %65 = arith.mulf %64, %63 : vector<32x128xf32>
    %cst_29 = arith.constant 9.99999974E-6 : f32
    %66 = vector.broadcast %cst_29 : f32 to vector<1x128xf32>
    %67 = arith.addf %61, %66 : vector<1x128xf32>
    %68 = math.rsqrt %67 : vector<1x128xf32>
    %69 = vector.broadcast %68 : vector<1x128xf32> to vector<32x128xf32>
    %70 = arith.mulf %65, %69 : vector<32x128xf32>
    %71 = vector.broadcast %44 : vector<1x128xf32> to vector<32x128xf32>
    %72 = arith.addf %70, %71 : vector<32x128xf32>
    %73 = arith.negf %72 : vector<32x128xf32>
    %74 = math.exp %73 : vector<32x128xf32>
    %cst_30 = arith.constant 1.000000e+00 : f32
    %75 = vector.broadcast %cst_30 : f32 to vector<32x128xf32>
    %76 = arith.addf %75, %74 : vector<32x128xf32>
    %77 = arith.divf %75, %76 : vector<32x128xf32>
    %cst_31 = arith.constant dense<0.000000e+00> : vector<128xf32>
    %78 = vector.multi_reduction <add>, %77, %cst_31 [0] : vector<32x128xf32> to vector<128xf32>
    %79 = vector.shape_cast %78 : vector<128xf32> to vector<1x128xf32>
    %cst_32 = arith.constant 3.200000e+01 : f32
    %80 = vector.broadcast %cst_32 : f32 to vector<1x128xf32>
    %81 = arith.divf %79, %80 : vector<1x128xf32>
    %82 = vector.broadcast %81 : vector<1x128xf32> to vector<32x128xf32>
    %83 = arith.subf %77, %82 : vector<32x128xf32>
    %84 = arith.mulf %83, %83 : vector<32x128xf32>
    %cst_33 = arith.constant dense<0.000000e+00> : vector<128xf32>
    %85 = vector.multi_reduction <add>, %84, %cst_33 [0] : vector<32x128xf32> to vector<128xf32>
    %86 = vector.shape_cast %85 : vector<128xf32> to vector<1x128xf32>
    %cst_34 = arith.constant 3.200000e+01 : f32
    %87 = vector.broadcast %cst_34 : f32 to vector<1x128xf32>
    %88 = arith.divf %86, %87 : vector<1x128xf32>
    %89 = vector.broadcast %81 : vector<1x128xf32> to vector<32x128xf32>
    %90 = arith.subf %77, %89 : vector<32x128xf32>
    %91 = vector.broadcast %45 : vector<1x128xf32> to vector<32x128xf32>
    %92 = arith.mulf %91, %90 : vector<32x128xf32>
    %cst_35 = arith.constant 9.99999974E-6 : f32
    %93 = vector.broadcast %cst_35 : f32 to vector<1x128xf32>
    %94 = arith.addf %88, %93 : vector<1x128xf32>
    %95 = math.rsqrt %94 : vector<1x128xf32>
    %96 = vector.broadcast %95 : vector<1x128xf32> to vector<32x128xf32>
    %97 = arith.mulf %92, %96 : vector<32x128xf32>
    %98 = vector.broadcast %46 : vector<1x128xf32> to vector<32x128xf32>
    %99 = arith.addf %97, %98 : vector<32x128xf32>
    %cst_36 = arith.constant 0.000000e+00 : f32
    %100 = vector.broadcast %cst_36 : f32 to vector<32x128xf32>
    %101 = arith.maximumf %99, %100 : vector<32x128xf32>
    %102 = arith.truncf %101 : vector<32x128xf32> to vector<32x128xbf16>
    %c0_37 = arith.constant 0 : index
    %c0_38 = arith.constant 0 : index
    %103 = vector.load %arg8[%c0_37, %c0_38] : memref<32x256xbf16, #tpu.memory_space<vmem>>, vector<32x128xbf16>
    tpu.vector_store %arg8[%c0_37, %c0_38], %102 {strides = array<i32>} : memref<32x256xbf16, #tpu.memory_space<vmem>>, vector<32x128xbf16>,
    %c1_39 = arith.constant 1 : index
    %104 = memref.load %arg0[%c1_39] : memref<2xf32, #tpu.memory_space<smem>>
    %cst_40 = arith.constant 1.000000e+00 : f32
    %105 = arith.addf %cst_40, %104 : f32
    %106 = arith.extf %102 : vector<32x128xbf16> to vector<32x128xf32>
    %107 = vector.broadcast %105 : f32 to vector<32x128xf32>
    %108 = arith.mulf %107, %106 : vector<32x128xf32>
    %cst_41 = arith.constant dense<0.000000e+00> : vector<32x128xf32>
    %109 = tpu.matmul %0, %102, %cst_41 {dimension_numbers = #tpu.dot_dimension_numbers<[1], [0], [0], [1], [0, 0, 1, 1], [], []>} : vector<32x32xbf16>, vector<32x128xbf16>, vector<32x128xf32> -> vector<32x128xf32>
    %110 = arith.addf %108, %109 : vector<32x128xf32>
    %c256 = arith.constant 256 : index
    %c0_42 = arith.constant 0 : index
    %111 = vector.load %arg3[%c256, %c0_42] : memref<512x128xbf16, #tpu.memory_space<vmem>>, vector<128x128xbf16>
    %c8 = arith.constant 8 : index
    %c0_43 = arith.constant 0 : index
    %112 = vector.load %arg4[%c8, %c0_43] : memref<16x128xf32, #tpu.memory_space<vmem>>, vector<1x128xf32>
    %c9 = arith.constant 9 : index
    %c0_44 = arith.constant 0 : index
    %113 = vector.load %arg4[%c9, %c0_44] : memref<16x128xf32, #tpu.memory_space<vmem>>, vector<1x128xf32>
    %c10 = arith.constant 10 : index
    %c0_45 = arith.constant 0 : index
    %114 = vector.load %arg4[%c10, %c0_45] : memref<16x128xf32, #tpu.memory_space<vmem>>, vector<1x128xf32>
    %115 = arith.truncf %110 : vector<32x128xf32> to vector<32x128xbf16>
    %cst_46 = arith.constant dense<0.000000e+00> : vector<32x128xf32>
    %116 = tpu.matmul %115, %111, %cst_46 {dimension_numbers = #tpu.dot_dimension_numbers<[1], [0], [0], [1], [0, 0, 1, 1], [], []>} : vector<32x128xbf16>, vector<128x128xbf16>, vector<32x128xf32> -> vector<32x128xf32>
    %117 = vector.broadcast %112 : vector<1x128xf32> to vector<32x128xf32>
    %118 = arith.addf %116, %117 : vector<32x128xf32>
    %cst_47 = arith.constant dense<0.000000e+00> : vector<128xf32>
    %119 = vector.multi_reduction <add>, %118, %cst_47 [0] : vector<32x128xf32> to vector<128xf32>
    %120 = vector.shape_cast %119 : vector<128xf32> to vector<1x128xf32>
    %cst_48 = arith.constant 3.200000e+01 : f32
    %121 = vector.broadcast %cst_48 : f32 to vector<1x128xf32>
    %122 = arith.divf %120, %121 : vector<1x128xf32>
    %123 = vector.broadcast %122 : vector<1x128xf32> to vector<32x128xf32>
    %124 = arith.subf %118, %123 : vector<32x128xf32>
    %125 = arith.mulf %124, %124 : vector<32x128xf32>
    %cst_49 = arith.constant dense<0.000000e+00> : vector<128xf32>
    %126 = vector.multi_reduction <add>, %125, %cst_49 [0] : vector<32x128xf32> to vector<128xf32>
    %127 = vector.shape_cast %126 : vector<128xf32> to vector<1x128xf32>
    %cst_50 = arith.constant 3.200000e+01 : f32
    %128 = vector.broadcast %cst_50 : f32 to vector<1x128xf32>
    %129 = arith.divf %127, %128 : vector<1x128xf32>
    %130 = vector.broadcast %122 : vector<1x128xf32> to vector<32x128xf32>
    %131 = arith.subf %118, %130 : vector<32x128xf32>
    %132 = vector.broadcast %113 : vector<1x128xf32> to vector<32x128xf32>
    %133 = arith.mulf %132, %131 : vector<32x128xf32>
    %cst_51 = arith.constant 9.99999974E-6 : f32
    %134 = vector.broadcast %cst_51 : f32 to vector<1x128xf32>
    %135 = arith.addf %129, %134 : vector<1x128xf32>
    %136 = math.rsqrt %135 : vector<1x128xf32>
    %137 = vector.broadcast %136 : vector<1x128xf32> to vector<32x128xf32>
    %138 = arith.mulf %133, %137 : vector<32x128xf32>
    %139 = vector.broadcast %114 : vector<1x128xf32> to vector<32x128xf32>
    %140 = arith.addf %138, %139 : vector<32x128xf32>
    %cst_52 = arith.constant 0.000000e+00 : f32
    %141 = vector.broadcast %cst_52 : f32 to vector<32x128xf32>
    %142 = arith.maximumf %140, %141 : vector<32x128xf32>
    %c384 = arith.constant 384 : index
    %c0_53 = arith.constant 0 : index
    %143 = vector.load %arg3[%c384, %c0_53] : memref<512x128xbf16, #tpu.memory_space<vmem>>, vector<128x128xbf16>
    %c11 = arith.constant 11 : index
    %c0_54 = arith.constant 0 : index
    %144 = vector.load %arg4[%c11, %c0_54] : memref<16x128xf32, #tpu.memory_space<vmem>>, vector<1x128xf32>
    %c12 = arith.constant 12 : index
    %c0_55 = arith.constant 0 : index
    %145 = vector.load %arg4[%c12, %c0_55] : memref<16x128xf32, #tpu.memory_space<vmem>>, vector<1x128xf32>
    %c13 = arith.constant 13 : index
    %c0_56 = arith.constant 0 : index
    %146 = vector.load %arg4[%c13, %c0_56] : memref<16x128xf32, #tpu.memory_space<vmem>>, vector<1x128xf32>
    %c14 = arith.constant 14 : index
    %c0_57 = arith.constant 0 : index
    %147 = vector.load %arg4[%c14, %c0_57] : memref<16x128xf32, #tpu.memory_space<vmem>>, vector<1x128xf32>
    %c15 = arith.constant 15 : index
    %c0_58 = arith.constant 0 : index
    %148 = vector.load %arg4[%c15, %c0_58] : memref<16x128xf32, #tpu.memory_space<vmem>>, vector<1x128xf32>
    %149 = arith.truncf %142 : vector<32x128xf32> to vector<32x128xbf16>
    %cst_59 = arith.constant dense<0.000000e+00> : vector<32x128xf32>
    %150 = tpu.matmul %149, %143, %cst_59 {dimension_numbers = #tpu.dot_dimension_numbers<[1], [0], [0], [1], [0, 0, 1, 1], [], []>} : vector<32x128xbf16>, vector<128x128xbf16>, vector<32x128xf32> -> vector<32x128xf32>
    %151 = vector.broadcast %144 : vector<1x128xf32> to vector<32x128xf32>
    %152 = arith.addf %150, %151 : vector<32x128xf32>
    %cst_60 = arith.constant dense<0.000000e+00> : vector<128xf32>
    %153 = vector.multi_reduction <add>, %152, %cst_60 [0] : vector<32x128xf32> to vector<128xf32>
    %154 = vector.shape_cast %153 : vector<128xf32> to vector<1x128xf32>
    %cst_61 = arith.constant 3.200000e+01 : f32
    %155 = vector.broadcast %cst_61 : f32 to vector<1x128xf32>
    %156 = arith.divf %154, %155 : vector<1x128xf32>
    %157 = vector.broadcast %156 : vector<1x128xf32> to vector<32x128xf32>
    %158 = arith.subf %152, %157 : vector<32x128xf32>
    %159 = arith.mulf %158, %158 : vector<32x128xf32>
    %cst_62 = arith.constant dense<0.000000e+00> : vector<128xf32>
    %160 = vector.multi_reduction <add>, %159, %cst_62 [0] : vector<32x128xf32> to vector<128xf32>
    %161 = vector.shape_cast %160 : vector<128xf32> to vector<1x128xf32>
    %cst_63 = arith.constant 3.200000e+01 : f32
    %162 = vector.broadcast %cst_63 : f32 to vector<1x128xf32>
    %163 = arith.divf %161, %162 : vector<1x128xf32>
    %164 = vector.broadcast %156 : vector<1x128xf32> to vector<32x128xf32>
    %165 = arith.subf %152, %164 : vector<32x128xf32>
    %166 = vector.broadcast %145 : vector<1x128xf32> to vector<32x128xf32>
    %167 = arith.mulf %166, %165 : vector<32x128xf32>
    %cst_64 = arith.constant 9.99999974E-6 : f32
    %168 = vector.broadcast %cst_64 : f32 to vector<1x128xf32>
    %169 = arith.addf %163, %168 : vector<1x128xf32>
    %170 = math.rsqrt %169 : vector<1x128xf32>
    %171 = vector.broadcast %170 : vector<1x128xf32> to vector<32x128xf32>
    %172 = arith.mulf %167, %171 : vector<32x128xf32>
    %173 = vector.broadcast %146 : vector<1x128xf32> to vector<32x128xf32>
    %174 = arith.addf %172, %173 : vector<32x128xf32>
    %175 = arith.negf %174 : vector<32x128xf32>
    %176 = math.exp %175 : vector<32x128xf32>
    %cst_65 = arith.constant 1.000000e+00 : f32
    %177 = vector.broadcast %cst_65 : f32 to vector<32x128xf32>
    %178 = arith.addf %177, %176 : vector<32x128xf32>
    %179 = arith.divf %177, %178 : vector<32x128xf32>
    %cst_66 = arith.constant dense<0.000000e+00> : vector<128xf32>
    %180 = vector.multi_reduction <add>, %179, %cst_66 [0] : vector<32x128xf32> to vector<128xf32>
    %181 = vector.shape_cast %180 : vector<128xf32> to vector<1x128xf32>
    %cst_67 = arith.constant 3.200000e+01 : f32
    %182 = vector.broadcast %cst_67 : f32 to vector<1x128xf32>
    %183 = arith.divf %181, %182 : vector<1x128xf32>
    %184 = vector.broadcast %183 : vector<1x128xf32> to vector<32x128xf32>
    %185 = arith.subf %179, %184 : vector<32x128xf32>
    %186 = arith.mulf %185, %185 : vector<32x128xf32>
    %cst_68 = arith.constant dense<0.000000e+00> : vector<128xf32>
    %187 = vector.multi_reduction <add>, %186, %cst_68 [0] : vector<32x128xf32> to vector<128xf32>
    %188 = vector.shape_cast %187 : vector<128xf32> to vector<1x128xf32>
    %cst_69 = arith.constant 3.200000e+01 : f32
    %189 = vector.broadcast %cst_69 : f32 to vector<1x128xf32>
    %190 = arith.divf %188, %189 : vector<1x128xf32>
    %191 = vector.broadcast %183 : vector<1x128xf32> to vector<32x128xf32>
    %192 = arith.subf %179, %191 : vector<32x128xf32>
    %193 = vector.broadcast %147 : vector<1x128xf32> to vector<32x128xf32>
    %194 = arith.mulf %193, %192 : vector<32x128xf32>
    %cst_70 = arith.constant 9.99999974E-6 : f32
    %195 = vector.broadcast %cst_70 : f32 to vector<1x128xf32>
    %196 = arith.addf %190, %195 : vector<1x128xf32>
    %197 = math.rsqrt %196 : vector<1x128xf32>
    %198 = vector.broadcast %197 : vector<1x128xf32> to vector<32x128xf32>
    %199 = arith.mulf %194, %198 : vector<32x128xf32>
    %200 = vector.broadcast %148 : vector<1x128xf32> to vector<32x128xf32>
    %201 = arith.addf %199, %200 : vector<32x128xf32>
    %cst_71 = arith.constant 0.000000e+00 : f32
    %202 = vector.broadcast %cst_71 : f32 to vector<32x128xf32>
    %203 = arith.maximumf %201, %202 : vector<32x128xf32>
    %204 = arith.truncf %203 : vector<32x128xf32> to vector<32x128xbf16>
    %c0_72 = arith.constant 0 : index
    %c128_73 = arith.constant 128 : index
    %205 = vector.load %arg8[%c0_72, %c128_73] : memref<32x256xbf16, #tpu.memory_space<vmem>>, vector<32x128xbf16>
    tpu.vector_store %arg8[%c0_72, %c128_73], %204 {strides = array<i32>} : memref<32x256xbf16, #tpu.memory_space<vmem>>, vector<32x128xbf16>,
    %c0_74 = arith.constant 0 : index
    %c0_75 = arith.constant 0 : index
    %206 = vector.load %arg8[%c0_74, %c0_75] : memref<32x256xbf16, #tpu.memory_space<vmem>>, vector<32x256xbf16>
    %c0_76 = arith.constant 0 : index
    %c0_77 = arith.constant 0 : index
    %207 = vector.load %arg5[%c0_76, %c0_77] : memref<256x128xbf16, #tpu.memory_space<vmem>>, vector<256x128xbf16>
    %cst_78 = arith.constant dense<0.000000e+00> : vector<32x128xf32>
    %208 = tpu.matmul %206, %207, %cst_78 {dimension_numbers = #tpu.dot_dimension_numbers<[1], [0], [0], [1], [0, 0, 1, 1], [], []>} : vector<32x256xbf16>, vector<256x128xbf16>, vector<32x128xf32> -> vector<32x128xf32>
    %c0_79 = arith.constant 0 : index
    %c0_80 = arith.constant 0 : index
    %209 = vector.load %arg6[%c0_79, %c0_80] : memref<1x128xf32, #tpu.memory_space<vmem>>, vector<1x128xf32>
    %210 = vector.broadcast %209 : vector<1x128xf32> to vector<32x128xf32>
    %211 = arith.addf %208, %210 : vector<32x128xf32>
    %c0_81 = arith.constant 0 : index
    %c0_82 = arith.constant 0 : index
    %212 = vector.load %arg7[%c0_81, %c0_82] : memref<32x128xf32, #tpu.memory_space<vmem>>, vector<32x128xf32>
    tpu.vector_store %arg7[%c0_81, %c0_82], %211 {strides = array<i32>} : memref<32x128xf32, #tpu.memory_space<vmem>>, vector<32x128xf32>,
    return
  }
}

</mosaic_0001>

<llo_original>
// kernel: tpu_custom_call.1
$region0: #{tpu_custom_call.1}
  #allocation0 [shape = 'u32[]', space=smem, size = 0x4, offset = 0x4, fixed_abs, tag = 'smem constant byte address 0x4 - core index']
  #allocation1 [shape = 'u32[144,128]{1,0:T(1,128)}', space=vmem, size = 0x12000, scoped, tag = 'internal scratch']
  #allocation2 [shape = 'bf16[32,256]{1,0:T(16,128)(2,1)}', space=vmem, size = 0x4000, scoped, tag = 'scratch operand']
  %s0 = inlined_call_operand.hbm [shape: f32[2], index: 0, kind: input, shape index: {}]
  %s1 = inlined_call_operand.hbm [shape: bf16[32,32], index: 1, kind: input, shape index: {}]
  %s2 = inlined_call_operand.hbm [shape: bf16[32,128], index: 2, kind: input, shape index: {}]
  %s3 = inlined_call_operand.hbm [shape: bf16[512,128], index: 3, kind: input, shape index: {}]
  %s4 = inlined_call_operand.hbm [shape: f32[16,128], index: 4, kind: input, shape index: {}]
  %s5 = inlined_call_operand.hbm [shape: bf16[256,128], index: 5, kind: input, shape index: {}]
  %s6 = inlined_call_operand.vmem [shape: f32[1,128], index: 6, kind: input, shape index: {}]
  %s7 = inlined_call_operand.hbm [shape: f32[32,128], index: 7, kind: output, shape index: {}]
  %s8 = sld [smem:[#allocation0]]
  $region62: #{tpu_custom_call.1} parent=0
    _
  %s10 = ssub.s32 1, %s8
  %s11 = scalar_select 0, %s10, %s8
  $region1: #{tpu_custom_call.1} parent=0
    #allocation3 [shape = 'u8[512]{0}', space=smem, size = 0x200, scoped, tag = 'input window, operand 0, single buffered']
    #allocation4 [shape = 's32[1]{0}', space=sflag, size = 0x4, scoped, tag = 'scoped memory for tpu_custom_call.1']
    #allocation5 [shape = 's32[1]{0}', space=sflag, size = 0x4, scoped, tag = 'scoped memory for tpu_custom_call.1']
    #allocation6 [shape = 's32[1]{0}', space=sflag, size = 0x4, scoped, tag = 'scoped memory for tpu_custom_call.1']
    #allocation7 [shape = 'u8[8192]{0}', space=vmem, size = 0x2000, scoped, tag = 'input window, operand 1, single buffered']
    #allocation8 [shape = 'u8[8192]{0}', space=vmem, size = 0x2000, scoped, tag = 'input window, operand 2, single buffered']
    #allocation9 [shape = 's32[1]{0}', space=sflag, size = 0x4, scoped, tag = 'scoped memory for tpu_custom_call.1']
    #allocation10 [shape = 'u8[131072]{0}', space=vmem, size = 0x20000, scoped, tag = 'input window, operand 3, single buffered']
    #allocation11 [shape = 'u8[8192]{0}', space=vmem, size = 0x2000, scoped, tag = 'input window, operand 4, single buffered']
    #allocation12 [shape = 's32[1]{0}', space=sflag, size = 0x4, scoped, tag = 'scoped memory for tpu_custom_call.1']
    #allocation13 [shape = 'u8[65536]{0}', space=vmem, size = 0x10000, scoped, tag = 'input window, operand 5, single buffered']
    #allocation14 [shape = 'u8[16384]{0}', space=vmem, size = 0x4000, scoped, tag = 'output window, operand 0, single buffered']
    %12 = vsyncpa [#allocation6], 0
    %13 = vsyncpa [#allocation4], 0
    %14 = vsyncpa [#allocation9], 0
    %15 = vsyncpa [#allocation12], 0
    %16 = vsyncpa [#allocation5], 0
    // Predicated region
    $region2: #{tpu_custom_call.1} parent=1 // pred_check
      _
    $region3: #{tpu_custom_call.1} parent=1 // pred_check_branch
      %18 = sbr.rel (0) target = $region5
    $region4: #{tpu_custom_call.1} parent=1 // pred_region
      %s20 = ssub.s32 16, 16
      %21 = vsyncadd [#allocation6], %s20
      %24 = dma.hbm_to_smem %s0, 16, [#allocation3], [#allocation6]
    $region5: #{tpu_custom_call.1} parent=1 // pred_fallthru
      _
    // Predicated region
    $region6: #{tpu_custom_call.1} parent=1 // pred_check
      _
    $region7: #{tpu_custom_call.1} parent=1 // pred_check_branch
      %26 = sbr.rel (0) target = $region9
    $region8: #{tpu_custom_call.1} parent=1 // pred_region
      %s28 = ssub.s32 256, 256
      %29 = vsyncadd [#allocation4], %s28
      %s30 = sshll.u32 [#allocation7], 4
      %s31 = int_to_ptr.vmem [resolvable:$true] %s30
      %36 = dma.hbm_to_vmem [thread:$0]  %s1, 256, %s31, [#allocation4], 64, 64, 4
    $region9: #{tpu_custom_call.1} parent=1 // pred_fallthru
      _
    // Predicated region
    $region10: #{tpu_custom_call.1} parent=1 // pred_check
      _
    $region11: #{tpu_custom_call.1} parent=1 // pred_check_branch
      %38 = sbr.rel (0) target = $region13
    $region12: #{tpu_custom_call.1} parent=1 // pred_region
      %s40 = ssub.s32 256, 256
      %41 = vsyncadd [#allocation9], %s40
      %s42 = sshll.u32 [#allocation8], 4
      %s43 = int_to_ptr.vmem [resolvable:$true] %s42
      %48 = dma.hbm_to_vmem [thread:$0]  %s2, 256, %s43, [#allocation9], 64, 64, 4
    $region13: #{tpu_custom_call.1} parent=1 // pred_fallthru
      _
    // Predicated region
    $region14: #{tpu_custom_call.1} parent=1 // pred_check
      _
    $region15: #{tpu_custom_call.1} parent=1 // pred_check_branch
      %50 = sbr.rel (0) target = $region17
    $region16: #{tpu_custom_call.1} parent=1 // pred_region
      %s52 = ssub.s32 4096, 4096
      %53 = vsyncadd [#allocation9], %s52
      %s54 = sshll.u32 [#allocation10], 4
      %s55 = int_to_ptr.vmem [resolvable:$true] %s54
      %60 = dma.hbm_to_vmem [thread:$0]  %s3, 4096, %s55, [#allocation9], 64, 64, 4
    $region17: #{tpu_custom_call.1} parent=1 // pred_fallthru
      _
    // Predicated region
    $region18: #{tpu_custom_call.1} parent=1 // pred_check
      _
    $region19: #{tpu_custom_call.1} parent=1 // pred_check_branch
      %62 = sbr.rel (0) target = $region21
    $region20: #{tpu_custom_call.1} parent=1 // pred_region
      %s64 = ssub.s32 256, 256
      %65 = vsyncadd [#allocation12], %s64
      %s66 = sshll.u32 [#allocation11], 4
      %s67 = int_to_ptr.vmem [resolvable:$true] %s66
      %72 = dma.hbm_to_vmem [thread:$0]  %s4, 256, %s67, [#allocation12], 128, 128, 8
    $region21: #{tpu_custom_call.1} parent=1 // pred_fallthru
      _
    // Predicated region
    $region22: #{tpu_custom_call.1} parent=1 // pred_check
      _
    $region23: #{tpu_custom_call.1} parent=1 // pred_check_branch
      %74 = sbr.rel (0) target = $region25
    $region24: #{tpu_custom_call.1} parent=1 // pred_region
      %s76 = ssub.s32 2048, 2048
      %77 = vsyncadd [#allocation12], %s76
      %s78 = sshll.u32 [#allocation13], 4
      %s79 = int_to_ptr.vmem [resolvable:$true] %s78
      %84 = dma.hbm_to_vmem [thread:$0]  %s5, 2048, %s79, [#allocation12], 64, 64, 4
    $region25: #{tpu_custom_call.1} parent=1 // pred_fallthru
      _
    // Predicated region
    $region26: #{tpu_custom_call.1} parent=1 // pred_check
      _
    $region27: #{tpu_custom_call.1} parent=1 // pred_check_branch
      %86 = sbr.rel (0) target = $region29
    $region28: #{tpu_custom_call.1} parent=1 // pred_region
      _
    $region29: #{tpu_custom_call.1} parent=1 // pred_fallthru
      _
    // Predicated region
    $region30: #{tpu_custom_call.1} parent=1 // pred_check
      _
    $region31: #{tpu_custom_call.1} parent=1 // pred_check_branch
      %88 = sbr.rel (0) target = $region33
    $region32: #{tpu_custom_call.1} parent=1 // pred_region
      %89 = dma.done [#allocation6], 16
    $region33: #{tpu_custom_call.1} parent=1 // pred_fallthru
      _
    // Predicated region
    $region34: #{tpu_custom_call.1} parent=1 // pred_check
      _
    $region35: #{tpu_custom_call.1} parent=1 // pred_check_branch
      %91 = sbr.rel (0) target = $region37
    $region36: #{tpu_custom_call.1} parent=1 // pred_region
      %92 = dma.done [#allocation4], 256
    $region37: #{tpu_custom_call.1} parent=1 // pred_fallthru
      _
    // Predicated region
    $region38: #{tpu_custom_call.1} parent=1 // pred_check
      _
    $region39: #{tpu_custom_call.1} parent=1 // pred_check_branch
      %94 = sbr.rel (0) target = $region41
    $region40: #{tpu_custom_call.1} parent=1 // pred_region
      %95 = dma.done [#allocation9], 256
    $region41: #{tpu_custom_call.1} parent=1 // pred_fallthru
      _
    // Predicated region
    $region42: #{tpu_custom_call.1} parent=1 // pred_check
      _
    $region43: #{tpu_custom_call.1} parent=1 // pred_check_branch
      %97 = sbr.rel (0) target = $region45
    $region44: #{tpu_custom_call.1} parent=1 // pred_region
      %98 = dma.done [#allocation9], 4096
    $region45: #{tpu_custom_call.1} parent=1 // pred_fallthru
      _
    // Predicated region
    $region46: #{tpu_custom_call.1} parent=1 // pred_check
      _
    $region47: #{tpu_custom_call.1} parent=1 // pred_check_branch
      %100 = sbr.rel (0) target = $region49
    $region48: #{tpu_custom_call.1} parent=1 // pred_region
      %101 = dma.done [#allocation12], 256
    $region49: #{tpu_custom_call.1} parent=1 // pred_fallthru
      _
    // Predicated region
    $region50: #{tpu_custom_call.1} parent=1 // pred_check
      _
    $region51: #{tpu_custom_call.1} parent=1 // pred_check_branch
      %103 = sbr.rel (0) target = $region53
    $region52: #{tpu_custom_call.1} parent=1 // pred_region
      %104 = dma.done [#allocation12], 2048
    $region53: #{tpu_custom_call.1} parent=1 // pred_fallthru
      _
    %105 = sfence
    %v107 = vld [vmem:[#allocation7] sm:$0xf]
    %v108 = vld [vmem:[#allocation7 + $0x4] sm:$0xf]
    %v109 = vld [vmem:[#allocation7 + $0x8] sm:$0xf]
    %v110 = vld [vmem:[#allocation7 + $0xc] sm:$0xf]
    %v111 = vld [vmem:[#allocation8] sm:$0xf]
    %v112 = vld [vmem:[#allocation8 + $0x4] sm:$0xf]
    %v113 = vld [vmem:[#allocation8 + $0x8] sm:$0xf]
    %v114 = vld [vmem:[#allocation8 + $0xc] sm:$0xf]
    %s115 = sld [smem:[#allocation3]]
    %s116 = sadd.f32 %s115, 1.0
    %v117 = vunpack.c.l.bf16 %v111
    %v118 = vunpack.c.l.bf16 %v112
    %v119 = vunpack.c.l.bf16 %v113
    %v120 = vunpack.c.l.bf16 %v114
    %v121 = vstv %s116
    %v122 = vmul.f32 %v121, %v117
    %v123 = vmul.f32 %v121, %v118
    %v124 = vmul.f32 %v121, %v119
    %v125 = vmul.f32 %v121, %v120
    %v130 = vunpack.c.l.b16 %v107
    %v131 = vunpack.c.l.b16 %v108
    %v132 = vunpack.c.l.b16 %v109
    %v133 = vunpack.c.l.b16 %v110
    %v134 = vpack.c.b16 %v131, %v130
    %v135 = vpack.c.b16 %v133, %v132
    %v140 = vunpack.c.l.b16 %v111
    %v141 = vunpack.c.l.b16 %v112
    %v142 = vunpack.c.l.b16 %v113
    %v143 = vunpack.c.l.b16 %v114
    %v144 = vpack.c.b16 %v141, %v140
    %v145 = vpack.c.b16 %v143, %v142
    %vm148 = vcmask 261120
    %v150 = vsel %vm148, %v134, 0
    %v153 = vsel %vm148, %v135, 0
    %155 = vmatprep.subr.bf16.mxu0 0
    %156 = vmatpush1.bf16.msra.mxu0 %v144
    %157 = vmatprep.subr.bf16.mxu0 0
    %158 = vmatpush1.bf16.msra.mxu0 %v145
    %159 = vmatprep.subr.bf16.mxu0 0
    %160 = vmatpush1.bf16.msra.mxu0 0
    %161 = vmatprep.subr.bf16.mxu0 0
    %162 = vmatpush1.bf16.msra.mxu0 0
    %163 = vmatprep.subr.bf16.mxu0 0
    %164 = vmatpush1.bf16.msra.mxu0 0
    %165 = vmatprep.subr.bf16.mxu0 0
    %166 = vmatpush1.bf16.msra.mxu0 0
    %167 = vmatprep.subr.bf16.mxu0 0
    %168 = vmatpush1.bf16.msra.mxu0 0
    %169 = vmatprep.subr.bf16.mxu0 0
    %170 = vmatpush1.bf16.msra.mxu0 0
    %171 = vmatprep.subr.bf16.mxu0 0
    %172 = vmatpush1.bf16.msra.mxu0 0
    %173 = vmatprep.subr.bf16.mxu0 0
    %174 = vmatpush1.bf16.msra.mxu0 0
    %175 = vmatprep.subr.bf16.mxu0 0
    %176 = vmatpush1.bf16.msra.mxu0 0
    %177 = vmatprep.subr.bf16.mxu0 0
    %178 = vmatpush1.bf16.msra.mxu0 0
    %179 = vmatprep.subr.bf16.mxu0 0
    %180 = vmatpush1.bf16.msra.mxu0 0
    %181 = vmatprep.subr.bf16.mxu0 0
    %182 = vmatpush1.bf16.msra.mxu0 0
    %183 = vmatprep.subr.bf16.mxu0 0
    %184 = vmatpush1.bf16.msra.mxu0 0
    %185 = vmatprep.subr.bf16.mxu0 0
    %186 = vmatpush1.bf16.msra.mxu0 0
    %187 = vmatprep.mubr.bf16.mxu0 0
    %188 = vmatmul.mubr.bf16.gmra.mrb[0].mxu0 %v150
    %v189 = vpop.f32.mrb[0].mxu0
    %v190 = vadd.f32 0.0, %v189
    %v191 = vpop.f32.mrb[0].mxu0
    %v192 = vpop.f32.mrb[0].mxu0
    %v193 = vadd.f32 0.0, %v192
    %v194 = vpop.f32.mrb[0].mxu0
    %195 = vmatprep.mubr.bf16.mxu0 0
    %196 = vmatmul.mubr.bf16.gmra.mrb[0].mxu0 %v153
    %v197 = vpop.f32.mrb[0].mxu0
    %v198 = vadd.f32 0.0, %v197
    %v199 = vpop.f32.mrb[0].mxu0
    %v200 = vpop.f32.mrb[0].mxu0
    %v201 = vadd.f32 0.0, %v200
    %v202 = vpop.f32.mrb[0].mxu0
    %203 = vdwg.mxu0
    %v204 = vadd.f32 %v122, %v190
    %v205 = vadd.f32 %v123, %v193
    %v206 = vadd.f32 %v124, %v198
    %v207 = vadd.f32 %v125, %v201
    %v208 = vld [vmem:[#allocation10] sm:$0xf]
    %v209 = vld [vmem:[#allocation10 + $0x4] sm:$0xf]
    %v210 = vld [vmem:[#allocation10 + $0x8] sm:$0xf]
    %v211 = vld [vmem:[#allocation10 + $0xc] sm:$0xf]
    %v212 = vld [vmem:[#allocation10 + $0x10] sm:$0xf]
    %v213 = vld [vmem:[#allocation10 + $0x14] sm:$0xf]
    %v214 = vld [vmem:[#allocation10 + $0x18] sm:$0xf]
    %v215 = vld [vmem:[#allocation10 + $0x1c] sm:$0xf]
    %v216 = vld [vmem:[#allocation10 + $0x20] sm:$0xf]
    %v217 = vld [vmem:[#allocation10 + $0x24] sm:$0xf]
    %v218 = vld [vmem:[#allocation10 + $0x28] sm:$0xf]
    %v219 = vld [vmem:[#allocation10 + $0x2c] sm:$0xf]
    %v220 = vld [vmem:[#allocation10 + $0x30] sm:$0xf]
    %v221 = vld [vmem:[#allocation10 + $0x34] sm:$0xf]
    %v222 = vld [vmem:[#allocation10 + $0x38] sm:$0xf]
    %v223 = vld [vmem:[#allocation10 + $0x3c] sm:$0xf]
    %v224 = vld [vmem:[#allocation11] sm:$0x1]
    %v225 = vld [vmem:[#allocation11 + $0x1] sm:$0x1]
    %v226 = vld [vmem:[#allocation11 + $0x2] sm:$0x1]
    %v227 = vpack.c.bf16 %v205, %v204
    %v228 = vpack.c.bf16 %v207, %v206
    %v229 = vlaneseq
    %v230 = vshrl.u32 %v229, 7
    %v231 = vsub.s32 0, %v230
    %v232 = vrot.slane %v224, %v231
    %v249 = vunpack.c.l.b16 %v208
    %v250 = vunpack.c.l.b16 %v209
    %v251 = vunpack.c.l.b16 %v210
    %v252 = vunpack.c.l.b16 %v211
    %v253 = vunpack.c.l.b16 %v212
    %v254 = vunpack.c.l.b16 %v213
    %v255 = vunpack.c.l.b16 %v214
    %v256 = vunpack.c.l.b16 %v215
    %v257 = vunpack.c.l.b16 %v216
    %v258 = vunpack.c.l.b16 %v217
    %v259 = vunpack.c.l.b16 %v218
    %v260 = vunpack.c.l.b16 %v219
    %v261 = vunpack.c.l.b16 %v220
    %v262 = vunpack.c.l.b16 %v221
    %v263 = vunpack.c.l.b16 %v222
    %v264 = vunpack.c.l.b16 %v223
    %v265 = vpack.c.b16 %v250, %v249
    %v266 = vpack.c.b16 %v252, %v251
    %v267 = vpack.c.b16 %v254, %v253
    %v268 = vpack.c.b16 %v256, %v255
    %v269 = vpack.c.b16 %v258, %v257
    %v270 = vpack.c.b16 %v260, %v259
    %v271 = vpack.c.b16 %v262, %v261
    %v272 = vpack.c.b16 %v264, %v263
    %281 = vmatprep.subr.bf16.mxu0 0
    %282 = vmatpush1.bf16.msra.mxu0 %v265
    %283 = vmatprep.subr.bf16.mxu0 0
    %284 = vmatpush1.bf16.msra.mxu0 %v266
    %285 = vmatprep.subr.bf16.mxu0 0
    %286 = vmatpush1.bf16.msra.mxu0 %v267
    %287 = vmatprep.subr.bf16.mxu0 0
    %288 = vmatpush1.bf16.msra.mxu0 %v268
    %289 = vmatprep.subr.bf16.mxu0 0
    %290 = vmatpush1.bf16.msra.mxu0 %v269
    %291 = vmatprep.subr.bf16.mxu0 0
    %292 = vmatpush1.bf16.msra.mxu0 %v270
    %293 = vmatprep.subr.bf16.mxu0 0
    %294 = vmatpush1.bf16.msra.mxu0 %v271
    %295 = vmatprep.subr.bf16.mxu0 0
    %296 = vmatpush1.bf16.msra.mxu0 %v272
    %297 = vmatprep.subr.bf16.mxu0 0
    %298 = vmatpush1.bf16.msra.mxu0 0
    %299 = vmatprep.subr.bf16.mxu0 0
    %300 = vmatpush1.bf16.msra.mxu0 0
    %301 = vmatprep.subr.bf16.mxu0 0
    %302 = vmatpush1.bf16.msra.mxu0 0
    %303 = vmatprep.subr.bf16.mxu0 0
    %304 = vmatpush1.bf16.msra.mxu0 0
    %305 = vmatprep.subr.bf16.mxu0 0
    %306 = vmatpush1.bf16.msra.mxu0 0
    %307 = vmatprep.subr.bf16.mxu0 0
    %308 = vmatpush1.bf16.msra.mxu0 0
    %309 = vmatprep.subr.bf16.mxu0 0
    %310 = vmatpush1.bf16.msra.mxu0 0
    %311 = vmatprep.subr.bf16.mxu0 0
    %312 = vmatpush1.bf16.msra.mxu0 0
    %313 = vmatprep.mubr.bf16.mxu0 0
    %314 = vmatmul.mubr.bf16.gmra.mrb[0].mxu0 %v227
    %v315 = vpop.f32.mrb[0].mxu0
    %v316 = vadd.f32 %v232, %v315
    %v317 = vpop.f32.mrb[0].mxu0
    %v318 = vpop.f32.mrb[0].mxu0
    %v319 = vadd.f32 %v232, %v318
    %v320 = vpop.f32.mrb[0].mxu0
    %321 = vmatprep.mubr.bf16.mxu0 0
    %322 = vmatmul.mubr.bf16.gmra.mrb[0].mxu0 %v228
    %v323 = vpop.f32.mrb[0].mxu0
    %v324 = vadd.f32 %v232, %v323
    %v325 = vpop.f32.mrb[0].mxu0
    %v326 = vpop.f32.mrb[0].mxu0
    %v327 = vadd.f32 %v232, %v326
    %v328 = vpop.f32.mrb[0].mxu0
    %329 = vdwg.mxu0
    %v330 = vadd.f32 %v316, %v319
    %v331 = vadd.f32 %v330, %v324
    %v332 = vadd.f32 %v331, %v327
    %v333 = vrot.slane %v332, 4
    %v334 = vadd.f32 %v332, %v333
    %v335 = vrot.slane %v334, 2
    %v336 = vadd.f32 %v334, %v335
    %v337 = vrot.slane %v336, 1
    %v338 = vadd.f32 %v336, %v337
    %v339 = vrcp.pop 32.0
    %v340 = vmul.f32 %v338, %v339
    %v341 = vsub.f32 %v316, %v340
    %v342 = vsub.f32 %v319, %v340
    %v343 = vsub.f32 %v324, %v340
    %v344 = vsub.f32 %v327, %v340
    %v345 = vmul.f32 %v341, %v341
    %v346 = vmul.f32 %v342, %v342
    %v347 = vmul.f32 %v343, %v343
    %v348 = vmul.f32 %v344, %v344
    %v349 = vadd.f32 %v345, %v346
    %v350 = vadd.f32 %v349, %v347
    %v351 = vadd.f32 %v350, %v348
    %v352 = vrot.slane %v351, 4
    %v353 = vadd.f32 %v351, %v352
    %v354 = vrot.slane %v353, 2
    %v355 = vadd.f32 %v353, %v354
    %v356 = vrot.slane %v355, 1
    %v357 = vadd.f32 %v355, %v356
    %v358 = vmul.f32 %v357, %v339
    %v359 = vlaneseq
    %v360 = vshrl.u32 %v359, 7
    %v361 = vsub.s32 0, %v360
    %v362 = vrot.slane %v225, %v361
    %v363 = vmul.f32 %v362, %v341
    %v364 = vmul.f32 %v362, %v342
    %v365 = vmul.f32 %v362, %v343
    %v366 = vmul.f32 %v362, %v344
    %v367 = vadd.f32 %v358, 1e-05
    %v368 = vrsqrt.pop %v367
    %v369 = vmul.f32 %v363, %v368
    %v370 = vmul.f32 %v364, %v368
    %v371 = vmul.f32 %v365, %v368
    %v372 = vmul.f32 %v366, %v368
    %v373 = vlaneseq
    %v374 = vshrl.u32 %v373, 7
    %v375 = vsub.s32 0, %v374
    %v376 = vrot.slane %v226, %v375
    %v377 = vadd.f32 %v369, %v376
    %v378 = vadd.f32 %v370, %v376
    %v379 = vadd.f32 %v371, %v376
    %v380 = vadd.f32 %v372, %v376
    %v381 = vmax.f32 %v377, 0.0
    %v382 = vmax.f32 %v378, 0.0
    %v383 = vmax.f32 %v379, 0.0
    %v384 = vmax.f32 %v380, 0.0
    %v385 = vld [vmem:[#allocation10 + $0x40] sm:$0xf]
    %v386 = vld [vmem:[#allocation10 + $0x44] sm:$0xf]
    %v387 = vld [vmem:[#allocation10 + $0x48] sm:$0xf]
    %v388 = vld [vmem:[#allocation10 + $0x4c] sm:$0xf]
    %v389 = vld [vmem:[#allocation10 + $0x50] sm:$0xf]
    %v390 = vld [vmem:[#allocation10 + $0x54] sm:$0xf]
    %v391 = vld [vmem:[#allocation10 + $0x58] sm:$0xf]
    %v392 = vld [vmem:[#allocation10 + $0x5c] sm:$0xf]
    %v393 = vld [vmem:[#allocation10 + $0x60] sm:$0xf]
    %v394 = vld [vmem:[#allocation10 + $0x64] sm:$0xf]
    %v395 = vld [vmem:[#allocation10 + $0x68] sm:$0xf]
    %v396 = vld [vmem:[#allocation10 + $0x6c] sm:$0xf]
    %v397 = vld [vmem:[#allocation10 + $0x70] sm:$0xf]
    %v398 = vld [vmem:[#allocation10 + $0x74] sm:$0xf]
    %v399 = vld [vmem:[#allocation10 + $0x78] sm:$0xf]
    %v400 = vld [vmem:[#allocation10 + $0x7c] sm:$0xf]
    %v401 = vld [vmem:[#allocation11 + $0x3] sm:$0x1]
    %v402 = vld [vmem:[#allocation11 + $0x4] sm:$0x1]
    %v403 = vld [vmem:[#allocation11 + $0x5] sm:$0x1]
    %v404 = vld [vmem:[#allocation11 + $0x6] sm:$0x1]
    %v405 = vld [vmem:[#allocation11 + $0x7] sm:$0x1]
    %v406 = vpack.c.bf16 %v382, %v381
    %v407 = vpack.c.bf16 %v384, %v383
    %v408 = vlaneseq
    %v409 = vshrl.u32 %v408, 7
    %v410 = vsub.s32 0, %v409
    %v411 = vrot.slane %v401, %v410
    %v428 = vunpack.c.l.b16 %v385
    %v429 = vunpack.c.l.b16 %v386
    %v430 = vunpack.c.l.b16 %v387
    %v431 = vunpack.c.l.b16 %v388
    %v432 = vunpack.c.l.b16 %v389
    %v433 = vunpack.c.l.b16 %v390
    %v434 = vunpack.c.l.b16 %v391
    %v435 = vunpack.c.l.b16 %v392
    %v436 = vunpack.c.l.b16 %v393
    %v437 = vunpack.c.l.b16 %v394
    %v438 = vunpack.c.l.b16 %v395
    %v439 = vunpack.c.l.b16 %v396
    %v440 = vunpack.c.l.b16 %v397
    %v441 = vunpack.c.l.b16 %v398
    %v442 = vunpack.c.l.b16 %v399
    %v443 = vunpack.c.l.b16 %v400
    %v444 = vpack.c.b16 %v429, %v428
    %v445 = vpack.c.b16 %v431, %v430
    %v446 = vpack.c.b16 %v433, %v432
    %v447 = vpack.c.b16 %v435, %v434
    %v448 = vpack.c.b16 %v437, %v436
    %v449 = vpack.c.b16 %v439, %v438
    %v450 = vpack.c.b16 %v441, %v440
    %v451 = vpack.c.b16 %v443, %v442
    %460 = vmatprep.subr.bf16.mxu0 0
    %461 = vmatpush1.bf16.msra.mxu0 %v444
    %462 = vmatprep.subr.bf16.mxu0 0
    %463 = vmatpush1.bf16.msra.mxu0 %v445
    %464 = vmatprep.subr.bf16.mxu0 0
    %465 = vmatpush1.bf16.msra.mxu0 %v446
    %466 = vmatprep.subr.bf16.mxu0 0
    %467 = vmatpush1.bf16.msra.mxu0 %v447
    %468 = vmatprep.subr.bf16.mxu0 0
    %469 = vmatpush1.bf16.msra.mxu0 %v448
    %470 = vmatprep.subr.bf16.mxu0 0
    %471 = vmatpush1.bf16.msra.mxu0 %v449
    %472 = vmatprep.subr.bf16.mxu0 0
    %473 = vmatpush1.bf16.msra.mxu0 %v450
    %474 = vmatprep.subr.bf16.mxu0 0
    %475 = vmatpush1.bf16.msra.mxu0 %v451
    %476 = vmatprep.subr.bf16.mxu0 0
    %477 = vmatpush1.bf16.msra.mxu0 0
    %478 = vmatprep.subr.bf16.mxu0 0
    %479 = vmatpush1.bf16.msra.mxu0 0
    %480 = vmatprep.subr.bf16.mxu0 0
    %481 = vmatpush1.bf16.msra.mxu0 0
    %482 = vmatprep.subr.bf16.mxu0 0
    %483 = vmatpush1.bf16.msra.mxu0 0
    %484 = vmatprep.subr.bf16.mxu0 0
    %485 = vmatpush1.bf16.msra.mxu0 0
    %486 = vmatprep.subr.bf16.mxu0 0
    %487 = vmatpush1.bf16.msra.mxu0 0
    %488 = vmatprep.subr.bf16.mxu0 0
    %489 = vmatpush1.bf16.msra.mxu0 0
    %490 = vmatprep.subr.bf16.mxu0 0
    %491 = vmatpush1.bf16.msra.mxu0 0
    %492 = vmatprep.mubr.bf16.mxu0 0
    %493 = vmatmul.mubr.bf16.gmra.mrb[0].mxu0 %v406
    %v494 = vpop.f32.mrb[0].mxu0
    %v495 = vadd.f32 %v411, %v494
    %v496 = vpop.f32.mrb[0].mxu0
    %v497 = vpop.f32.mrb[0].mxu0
    %v498 = vadd.f32 %v411, %v497
    %v499 = vpop.f32.mrb[0].mxu0
    %500 = vmatprep.mubr.bf16.mxu0 0
    %501 = vmatmul.mubr.bf16.gmra.mrb[0].mxu0 %v407
    %v502 = vpop.f32.mrb[0].mxu0
    %v503 = vadd.f32 %v411, %v502
    %v504 = vpop.f32.mrb[0].mxu0
    %v505 = vpop.f32.mrb[0].mxu0
    %v506 = vadd.f32 %v411, %v505
    %v507 = vpop.f32.mrb[0].mxu0
    %508 = vdwg.mxu0
    %v509 = vadd.f32 %v495, %v498
    %v510 = vadd.f32 %v509, %v503
    %v511 = vadd.f32 %v510, %v506
    %v512 = vrot.slane %v511, 4
    %v513 = vadd.f32 %v511, %v512
    %v514 = vrot.slane %v513, 2
    %v515 = vadd.f32 %v513, %v514
    %v516 = vrot.slane %v515, 1
    %v517 = vadd.f32 %v515, %v516
    %v518 = vmul.f32 %v517, %v339
    %v519 = vsub.f32 %v495, %v518
    %v520 = vsub.f32 %v498, %v518
    %v521 = vsub.f32 %v503, %v518
    %v522 = vsub.f32 %v506, %v518
    %v523 = vmul.f32 %v519, %v519
    %v524 = vmul.f32 %v520, %v520
    %v525 = vmul.f32 %v521, %v521
    %v526 = vmul.f32 %v522, %v522
    %v527 = vadd.f32 %v523, %v524
    %v528 = vadd.f32 %v527, %v525
    %v529 = vadd.f32 %v528, %v526
    %v530 = vrot.slane %v529, 4
    %v531 = vadd.f32 %v529, %v530
    %v532 = vrot.slane %v531, 2
    %v533 = vadd.f32 %v531, %v532
    %v534 = vrot.slane %v533, 1
    %v535 = vadd.f32 %v533, %v534
    %v536 = vmul.f32 %v535, %v339
    %v537 = vlaneseq
    %v538 = vshrl.u32 %v537, 7
    %v539 = vsub.s32 0, %v538
    %v540 = vrot.slane %v402, %v539
    %v541 = vmul.f32 %v540, %v519
    %v542 = vmul.f32 %v540, %v520
    %v543 = vmul.f32 %v540, %v521
    %v544 = vmul.f32 %v540, %v522
    %v545 = vadd.f32 %v536, 1e-05
    %v546 = vrsqrt.pop %v545
    %v547 = vmul.f32 %v541, %v546
    %v548 = vmul.f32 %v542, %v546
    %v549 = vmul.f32 %v543, %v546
    %v550 = vmul.f32 %v544, %v546
    %v551 = vlaneseq
    %v552 = vshrl.u32 %v551, 7
    %v553 = vsub.s32 0, %v552
    %v554 = vrot.slane %v403, %v553
    %v555 = vadd.f32 %v547, %v554
    %v556 = vadd.f32 %v548, %v554
    %v557 = vadd.f32 %v549, %v554
    %v558 = vadd.f32 %v550, %v554
    %v559 = vxor.u32 %v555, 2147483648
    %v560 = vxor.u32 %v556, 2147483648
    %v561 = vxor.u32 %v557, 2147483648
    %v562 = vxor.u32 %v558, 2147483648
    %v563 = vmul.f32 %v559, 1.442695
    %v564 = vpow.pop %v563
    %v565 = vmul.f32 %v560, 1.442695
    %v566 = vpow.pop %v565
    %v567 = vmul.f32 %v561, 1.442695
    %v568 = vpow.pop %v567
    %v569 = vmul.f32 %v562, 1.442695
    %v570 = vpow.pop %v569
    %v571 = vadd.f32 %v564, 1.0
    %v572 = vadd.f32 %v566, 1.0
    %v573 = vadd.f32 %v568, 1.0
    %v574 = vadd.f32 %v570, 1.0
    %v575 = vrcp.pop %v571
    %v576 = vmul.f32 1.0, %v575
    %v577 = vrcp.pop %v572
    %v578 = vmul.f32 1.0, %v577
    %v579 = vrcp.pop %v573
    %v580 = vmul.f32 1.0, %v579
    %v581 = vrcp.pop %v574
    %v582 = vmul.f32 1.0, %v581
    %v583 = vadd.f32 %v576, %v578
    %v584 = vadd.f32 %v583, %v580
    %v585 = vadd.f32 %v584, %v582
    %v586 = vrot.slane %v585, 4
    %v587 = vadd.f32 %v585, %v586
    %v588 = vrot.slane %v587, 2
    %v589 = vadd.f32 %v587, %v588
    %v590 = vrot.slane %v589, 1
    %v591 = vadd.f32 %v589, %v590
    %v592 = vmul.f32 %v591, %v339
    %v593 = vsub.f32 %v576, %v592
    %v594 = vsub.f32 %v578, %v592
    %v595 = vsub.f32 %v580, %v592
    %v596 = vsub.f32 %v582, %v592
    %v597 = vmul.f32 %v593, %v593
    %v598 = vmul.f32 %v594, %v594
    %v599 = vmul.f32 %v595, %v595
    %v600 = vmul.f32 %v596, %v596
    %v601 = vadd.f32 %v597, %v598
    %v602 = vadd.f32 %v601, %v599
    %v603 = vadd.f32 %v602, %v600
    %v604 = vrot.slane %v603, 4
    %v605 = vadd.f32 %v603, %v604
    %v606 = vrot.slane %v605, 2
    %v607 = vadd.f32 %v605, %v606
    %v608 = vrot.slane %v607, 1
    %v609 = vadd.f32 %v607, %v608
    %v610 = vmul.f32 %v609, %v339
    %v611 = vlaneseq
    %v612 = vshrl.u32 %v611, 7
    %v613 = vsub.s32 0, %v612
    %v614 = vrot.slane %v404, %v613
    %v615 = vmul.f32 %v614, %v593
    %v616 = vmul.f32 %v614, %v594
    %v617 = vmul.f32 %v614, %v595
    %v618 = vmul.f32 %v614, %v596
    %v619 = vadd.f32 %v610, 1e-05
    %v620 = vrsqrt.pop %v619
    %v621 = vmul.f32 %v615, %v620
    %v622 = vmul.f32 %v616, %v620
    %v623 = vmul.f32 %v617, %v620
    %v624 = vmul.f32 %v618, %v620
    %v625 = vlaneseq
    %v626 = vshrl.u32 %v625, 7
    %v627 = vsub.s32 0, %v626
    %v628 = vrot.slane %v405, %v627
    %v629 = vadd.f32 %v621, %v628
    %v630 = vadd.f32 %v622, %v628
    %v631 = vadd.f32 %v623, %v628
    %v632 = vadd.f32 %v624, %v628
    %v633 = vmax.f32 %v629, 0.0
    %v634 = vmax.f32 %v630, 0.0
    %v635 = vmax.f32 %v631, 0.0
    %v636 = vmax.f32 %v632, 0.0
    %v637 = vpack.c.bf16 %v634, %v633
    %v638 = vpack.c.bf16 %v636, %v635
    %639 = vst [vmem:[#allocation2] sm:$0xff] %v637
    %640 = vst [vmem:[#allocation2 + $0x10] sm:$0xff] %v638
    %s641 = sld [smem:[#allocation3 + $0x1]]
    %s642 = sadd.f32 %s641, 1.0
    %v643 = vunpack.c.l.bf16 %v637
    %v644 = vunpack.c.h.bf16 %v637
    %v645 = vunpack.c.l.bf16 %v638
    %v646 = vunpack.c.h.bf16 %v638
    %v647 = vstv %s642
    %v648 = vmul.f32 %v647, %v643
    %v649 = vmul.f32 %v647, %v644
    %v650 = vmul.f32 %v647, %v645
    %v651 = vmul.f32 %v647, %v646
    %652 = vmatprep.subr.bf16.mxu0 0
    %653 = vmatpush1.bf16.msra.mxu0 %v637
    %654 = vmatprep.subr.bf16.mxu0 0
    %655 = vmatpush1.bf16.msra.mxu0 %v638
    %656 = vmatprep.subr.bf16.mxu0 0
    %657 = vmatpush1.bf16.msra.mxu0 0
    %658 = vmatprep.subr.bf16.mxu0 0
    %659 = vmatpush1.bf16.msra.mxu0 0
    %660 = vmatprep.subr.bf16.mxu0 0
    %661 = vmatpush1.bf16.msra.mxu0 0
    %662 = vmatprep.subr.bf16.mxu0 0
    %663 = vmatpush1.bf16.msra.mxu0 0
    %664 = vmatprep.subr.bf16.mxu0 0
    %665 = vmatpush1.bf16.msra.mxu0 0
    %666 = vmatprep.subr.bf16.mxu0 0
    %667 = vmatpush1.bf16.msra.mxu0 0
    %668 = vmatprep.subr.bf16.mxu0 0
    %669 = vmatpush1.bf16.msra.mxu0 0
    %670 = vmatprep.subr.bf16.mxu0 0
    %671 = vmatpush1.bf16.msra.mxu0 0
    %672 = vmatprep.subr.bf16.mxu0 0
    %673 = vmatpush1.bf16.msra.mxu0 0
    %674 = vmatprep.subr.bf16.mxu0 0
    %675 = vmatpush1.bf16.msra.mxu0 0
    %676 = vmatprep.subr.bf16.mxu0 0
    %677 = vmatpush1.bf16.msra.mxu0 0
    %678 = vmatprep.subr.bf16.mxu0 0
    %679 = vmatpush1.bf16.msra.mxu0 0
    %680 = vmatprep.subr.bf16.mxu0 0
    %681 = vmatpush1.bf16.msra.mxu0 0
    %682 = vmatprep.subr.bf16.mxu0 0
    %683 = vmatpush1.bf16.msra.mxu0 0
    %684 = vmatprep.mubr.bf16.mxu0 0
    %685 = vmatmul.mubr.bf16.gmra.mrb[0].mxu0 %v150
    %v686 = vpop.f32.mrb[0].mxu0
    %v687 = vadd.f32 0.0, %v686
    %v688 = vpop.f32.mrb[0].mxu0
    %v689 = vpop.f32.mrb[0].mxu0
    %v690 = vadd.f32 0.0, %v689
    %v691 = vpop.f32.mrb[0].mxu0
    %692 = vmatprep.mubr.bf16.mxu0 0
    %693 = vmatmul.mubr.bf16.gmra.mrb[0].mxu0 %v153
    %v694 = vpop.f32.mrb[0].mxu0
    %v695 = vadd.f32 0.0, %v694
    %v696 = vpop.f32.mrb[0].mxu0
    %v697 = vpop.f32.mrb[0].mxu0
    %v698 = vadd.f32 0.0, %v697
    %v699 = vpop.f32.mrb[0].mxu0
    %700 = vdwg.mxu0
    %v701 = vadd.f32 %v648, %v687
    %v702 = vadd.f32 %v649, %v690
    %v703 = vadd.f32 %v650, %v695
    %v704 = vadd.f32 %v651, %v698
    %v705 = vld [vmem:[#allocation10 + $0x80] sm:$0xf]
    %v706 = vld [vmem:[#allocation10 + $0x84] sm:$0xf]
    %v707 = vld [vmem:[#allocation10 + $0x88] sm:$0xf]
    %v708 = vld [vmem:[#allocation10 + $0x8c] sm:$0xf]
    %v709 = vld [vmem:[#allocation10 + $0x90] sm:$0xf]
    %v710 = vld [vmem:[#allocation10 + $0x94] sm:$0xf]
    %v711 = vld [vmem:[#allocation10 + $0x98] sm:$0xf]
    %v712 = vld [vmem:[#allocation10 + $0x9c] sm:$0xf]
    %v713 = vld [vmem:[#allocation10 + $0xa0] sm:$0xf]
    %v714 = vld [vmem:[#allocation10 + $0xa4] sm:$0xf]
    %v715 = vld [vmem:[#allocation10 + $0xa8] sm:$0xf]
    %v716 = vld [vmem:[#allocation10 + $0xac] sm:$0xf]
    %v717 = vld [vmem:[#allocation10 + $0xb0] sm:$0xf]
    %v718 = vld [vmem:[#allocation10 + $0xb4] sm:$0xf]
    %v719 = vld [vmem:[#allocation10 + $0xb8] sm:$0xf]
    %v720 = vld [vmem:[#allocation10 + $0xbc] sm:$0xf]
    %v721 = vld [vmem:[#allocation11 + $0x8] sm:$0x1]
    %v722 = vld [vmem:[#allocation11 + $0x9] sm:$0x1]
    %v723 = vld [vmem:[#allocation11 + $0xa] sm:$0x1]
    %v724 = vpack.c.bf16 %v702, %v701
    %v725 = vpack.c.bf16 %v704, %v703
    %v726 = vlaneseq
    %v727 = vshrl.u32 %v726, 7
    %v728 = vsub.s32 0, %v727
    %v729 = vrot.slane %v721, %v728
    %v746 = vunpack.c.l.b16 %v705
    %v747 = vunpack.c.l.b16 %v706
    %v748 = vunpack.c.l.b16 %v707
    %v749 = vunpack.c.l.b16 %v708
    %v750 = vunpack.c.l.b16 %v709
    %v751 = vunpack.c.l.b16 %v710
    %v752 = vunpack.c.l.b16 %v711
    %v753 = vunpack.c.l.b16 %v712
    %v754 = vunpack.c.l.b16 %v713
    %v755 = vunpack.c.l.b16 %v714
    %v756 = vunpack.c.l.b16 %v715
    %v757 = vunpack.c.l.b16 %v716
    %v758 = vunpack.c.l.b16 %v717
    %v759 = vunpack.c.l.b16 %v718
    %v760 = vunpack.c.l.b16 %v719
    %v761 = vunpack.c.l.b16 %v720
    %v762 = vpack.c.b16 %v747, %v746
    %v763 = vpack.c.b16 %v749, %v748
    %v764 = vpack.c.b16 %v751, %v750
    %v765 = vpack.c.b16 %v753, %v752
    %v766 = vpack.c.b16 %v755, %v754
    %v767 = vpack.c.b16 %v757, %v756
    %v768 = vpack.c.b16 %v759, %v758
    %v769 = vpack.c.b16 %v761, %v760
    %778 = vmatprep.subr.bf16.mxu0 0
    %779 = vmatpush1.bf16.msra.mxu0 %v762
    %780 = vmatprep.subr.bf16.mxu0 0
    %781 = vmatpush1.bf16.msra.mxu0 %v763
    %782 = vmatprep.subr.bf16.mxu0 0
    %783 = vmatpush1.bf16.msra.mxu0 %v764
    %784 = vmatprep.subr.bf16.mxu0 0
    %785 = vmatpush1.bf16.msra.mxu0 %v765
    %786 = vmatprep.subr.bf16.mxu0 0
    %787 = vmatpush1.bf16.msra.mxu0 %v766
    %788 = vmatprep.subr.bf16.mxu0 0
    %789 = vmatpush1.bf16.msra.mxu0 %v767
    %790 = vmatprep.subr.bf16.mxu0 0
    %791 = vmatpush1.bf16.msra.mxu0 %v768
    %792 = vmatprep.subr.bf16.mxu0 0
    %793 = vmatpush1.bf16.msra.mxu0 %v769
    %794 = vmatprep.subr.bf16.mxu0 0
    %795 = vmatpush1.bf16.msra.mxu0 0
    %796 = vmatprep.subr.bf16.mxu0 0
    %797 = vmatpush1.bf16.msra.mxu0 0
    %798 = vmatprep.subr.bf16.mxu0 0
    %799 = vmatpush1.bf16.msra.mxu0 0
    %800 = vmatprep.subr.bf16.mxu0 0
    %801 = vmatpush1.bf16.msra.mxu0 0
    %802 = vmatprep.subr.bf16.mxu0 0
    %803 = vmatpush1.bf16.msra.mxu0 0
    %804 = vmatprep.subr.bf16.mxu0 0
    %805 = vmatpush1.bf16.msra.mxu0 0
    %806 = vmatprep.subr.bf16.mxu0 0
    %807 = vmatpush1.bf16.msra.mxu0 0
    %808 = vmatprep.subr.bf16.mxu0 0
    %809 = vmatpush1.bf16.msra.mxu0 0
    %810 = vmatprep.mubr.bf16.mxu0 0
    %811 = vmatmul.mubr.bf16.gmra.mrb[0].mxu0 %v724
    %v812 = vpop.f32.mrb[0].mxu0
    %v813 = vadd.f32 %v729, %v812
    %v814 = vpop.f32.mrb[0].mxu0
    %v815 = vpop.f32.mrb[0].mxu0
    %v816 = vadd.f32 %v729, %v815
    %v817 = vpop.f32.mrb[0].mxu0
    %818 = vmatprep.mubr.bf16.mxu0 0
    %819 = vmatmul.mubr.bf16.gmra.mrb[0].mxu0 %v725
    %v820 = vpop.f32.mrb[0].mxu0
    %v821 = vadd.f32 %v729, %v820
    %v822 = vpop.f32.mrb[0].mxu0
    %v823 = vpop.f32.mrb[0].mxu0
    %v824 = vadd.f32 %v729, %v823
    %v825 = vpop.f32.mrb[0].mxu0
    %826 = vdwg.mxu0
    %v827 = vadd.f32 %v813, %v816
    %v828 = vadd.f32 %v827, %v821
    %v829 = vadd.f32 %v828, %v824
    %v830 = vrot.slane %v829, 4
    %v831 = vadd.f32 %v829, %v830
    %v832 = vrot.slane %v831, 2
    %v833 = vadd.f32 %v831, %v832
    %v834 = vrot.slane %v833, 1
    %v835 = vadd.f32 %v833, %v834
    %v836 = vmul.f32 %v835, %v339
    %v837 = vsub.f32 %v813, %v836
    %v838 = vsub.f32 %v816, %v836
    %v839 = vsub.f32 %v821, %v836
    %v840 = vsub.f32 %v824, %v836
    %v841 = vmul.f32 %v837, %v837
    %v842 = vmul.f32 %v838, %v838
    %v843 = vmul.f32 %v839, %v839
    %v844 = vmul.f32 %v840, %v840
    %v845 = vadd.f32 %v841, %v842
    %v846 = vadd.f32 %v845, %v843
    %v847 = vadd.f32 %v846, %v844
    %v848 = vrot.slane %v847, 4
    %v849 = vadd.f32 %v847, %v848
    %v850 = vrot.slane %v849, 2
    %v851 = vadd.f32 %v849, %v850
    %v852 = vrot.slane %v851, 1
    %v853 = vadd.f32 %v851, %v852
    %v854 = vmul.f32 %v853, %v339
    %v855 = vlaneseq
    %v856 = vshrl.u32 %v855, 7
    %v857 = vsub.s32 0, %v856
    %v858 = vrot.slane %v722, %v857
    %v859 = vmul.f32 %v858, %v837
    %v860 = vmul.f32 %v858, %v838
    %v861 = vmul.f32 %v858, %v839
    %v862 = vmul.f32 %v858, %v840
    %v863 = vadd.f32 %v854, 1e-05
    %v864 = vrsqrt.pop %v863
    %v865 = vmul.f32 %v859, %v864
    %v866 = vmul.f32 %v860, %v864
    %v867 = vmul.f32 %v861, %v864
    %v868 = vmul.f32 %v862, %v864
    %v869 = vlaneseq
    %v870 = vshrl.u32 %v869, 7
    %v871 = vsub.s32 0, %v870
    %v872 = vrot.slane %v723, %v871
    %v873 = vadd.f32 %v865, %v872
    %v874 = vadd.f32 %v866, %v872
    %v875 = vadd.f32 %v867, %v872
    %v876 = vadd.f32 %v868, %v872
    %v877 = vmax.f32 %v873, 0.0
    %v878 = vmax.f32 %v874, 0.0
    %v879 = vmax.f32 %v875, 0.0
    %v880 = vmax.f32 %v876, 0.0
    %v881 = vld [vmem:[#allocation10 + $0xc0] sm:$0xf]
    %v882 = vld [vmem:[#allocation10 + $0xc4] sm:$0xf]
    %v883 = vld [vmem:[#allocation10 + $0xc8] sm:$0xf]
    %v884 = vld [vmem:[#allocation10 + $0xcc] sm:$0xf]
    %v885 = vld [vmem:[#allocation10 + $0xd0] sm:$0xf]
    %v886 = vld [vmem:[#allocation10 + $0xd4] sm:$0xf]
    %v887 = vld [vmem:[#allocation10 + $0xd8] sm:$0xf]
    %v888 = vld [vmem:[#allocation10 + $0xdc] sm:$0xf]
    %v889 = vld [vmem:[#allocation10 + $0xe0] sm:$0xf]
    %v890 = vld [vmem:[#allocation10 + $0xe4] sm:$0xf]
    %v891 = vld [vmem:[#allocation10 + $0xe8] sm:$0xf]
    %v892 = vld [vmem:[#allocation10 + $0xec] sm:$0xf]
    %v893 = vld [vmem:[#allocation10 + $0xf0] sm:$0xf]
    %v894 = vld [vmem:[#allocation10 + $0xf4] sm:$0xf]
    %v895 = vld [vmem:[#allocation10 + $0xf8] sm:$0xf]
    %v896 = vld [vmem:[#allocation10 + $0xfc] sm:$0xf]
    %v897 = vld [vmem:[#allocation11 + $0xb] sm:$0x1]
    %v898 = vld [vmem:[#allocation11 + $0xc] sm:$0x1]
    %v899 = vld [vmem:[#allocation11 + $0xd] sm:$0x1]
    %v900 = vld [vmem:[#allocation11 + $0xe] sm:$0x1]
    %v901 = vld [vmem:[#allocation11 + $0xf] sm:$0x1]
    %v902 = vpack.c.bf16 %v878, %v877
    %v903 = vpack.c.bf16 %v880, %v879
    %v904 = vlaneseq
    %v905 = vshrl.u32 %v904, 7
    %v906 = vsub.s32 0, %v905
    %v907 = vrot.slane %v897, %v906
    %v924 = vunpack.c.l.b16 %v881
    %v925 = vunpack.c.l.b16 %v882
    %v926 = vunpack.c.l.b16 %v883
    %v927 = vunpack.c.l.b16 %v884
    %v928 = vunpack.c.l.b16 %v885
    %v929 = vunpack.c.l.b16 %v886
    %v930 = vunpack.c.l.b16 %v887
    %v931 = vunpack.c.l.b16 %v888
    %v932 = vunpack.c.l.b16 %v889
    %v933 = vunpack.c.l.b16 %v890
    %v934 = vunpack.c.l.b16 %v891
    %v935 = vunpack.c.l.b16 %v892
    %v936 = vunpack.c.l.b16 %v893
    %v937 = vunpack.c.l.b16 %v894
    %v938 = vunpack.c.l.b16 %v895
    %v939 = vunpack.c.l.b16 %v896
    %v940 = vpack.c.b16 %v925, %v924
    %v941 = vpack.c.b16 %v927, %v926
    %v942 = vpack.c.b16 %v929, %v928
    %v943 = vpack.c.b16 %v931, %v930
    %v944 = vpack.c.b16 %v933, %v932
    %v945 = vpack.c.b16 %v935, %v934
    %v946 = vpack.c.b16 %v937, %v936
    %v947 = vpack.c.b16 %v939, %v938
    %956 = vmatprep.subr.bf16.mxu0 0
    %957 = vmatpush1.bf16.msra.mxu0 %v940
    %958 = vmatprep.subr.bf16.mxu0 0
    %959 = vmatpush1.bf16.msra.mxu0 %v941
    %960 = vmatprep.subr.bf16.mxu0 0
    %961 = vmatpush1.bf16.msra.mxu0 %v942
    %962 = vmatprep.subr.bf16.mxu0 0
    %963 = vmatpush1.bf16.msra.mxu0 %v943
    %964 = vmatprep.subr.bf16.mxu0 0
    %965 = vmatpush1.bf16.msra.mxu0 %v944
    %966 = vmatprep.subr.bf16.mxu0 0
    %967 = vmatpush1.bf16.msra.mxu0 %v945
    %968 = vmatprep.subr.bf16.mxu0 0
    %969 = vmatpush1.bf16.msra.mxu0 %v946
    %970 = vmatprep.subr.bf16.mxu0 0
    %971 = vmatpush1.bf16.msra.mxu0 %v947
    %972 = vmatprep.subr.bf16.mxu0 0
    %973 = vmatpush1.bf16.msra.mxu0 0
    %974 = vmatprep.subr.bf16.mxu0 0
    %975 = vmatpush1.bf16.msra.mxu0 0
    %976 = vmatprep.subr.bf16.mxu0 0
    %977 = vmatpush1.bf16.msra.mxu0 0
    %978 = vmatprep.subr.bf16.mxu0 0
    %979 = vmatpush1.bf16.msra.mxu0 0
    %980 = vmatprep.subr.bf16.mxu0 0
    %981 = vmatpush1.bf16.msra.mxu0 0
    %982 = vmatprep.subr.bf16.mxu0 0
    %983 = vmatpush1.bf16.msra.mxu0 0
    %984 = vmatprep.subr.bf16.mxu0 0
    %985 = vmatpush1.bf16.msra.mxu0 0
    %986 = vmatprep.subr.bf16.mxu0 0
    %987 = vmatpush1.bf16.msra.mxu0 0
    %988 = vmatprep.mubr.bf16.mxu0 0
    %989 = vmatmul.mubr.bf16.gmra.mrb[0].mxu0 %v902
    %v990 = vpop.f32.mrb[0].mxu0
    %v991 = vadd.f32 %v907, %v990
    %v992 = vpop.f32.mrb[0].mxu0
    %v993 = vpop.f32.mrb[0].mxu0
    %v994 = vadd.f32 %v907, %v993
    %v995 = vpop.f32.mrb[0].mxu0
    %996 = vmatprep.mubr.bf16.mxu0 0
    %997 = vmatmul.mubr.bf16.gmra.mrb[0].mxu0 %v903
    %v998 = vpop.f32.mrb[0].mxu0
    %v999 = vadd.f32 %v907, %v998
    %v1000 = vpop.f32.mrb[0].mxu0
    %v1001 = vpop.f32.mrb[0].mxu0
    %v1002 = vadd.f32 %v907, %v1001
    %v1003 = vpop.f32.mrb[0].mxu0
    %1004 = vdwg.mxu0
    %v1005 = vadd.f32 %v991, %v994
    %v1006 = vadd.f32 %v1005, %v999
    %v1007 = vadd.f32 %v1006, %v1002
    %v1008 = vrot.slane %v1007, 4
    %v1009 = vadd.f32 %v1007, %v1008
    %v1010 = vrot.slane %v1009, 2
    %v1011 = vadd.f32 %v1009, %v1010
    %v1012 = vrot.slane %v1011, 1
    %v1013 = vadd.f32 %v1011, %v1012
    %v1014 = vmul.f32 %v1013, %v339
    %v1015 = vsub.f32 %v991, %v1014
    %v1016 = vsub.f32 %v994, %v1014
    %v1017 = vsub.f32 %v999, %v1014
    %v1018 = vsub.f32 %v1002, %v1014
    %v1019 = vmul.f32 %v1015, %v1015
    %v1020 = vmul.f32 %v1016, %v1016
    %v1021 = vmul.f32 %v1017, %v1017
    %v1022 = vmul.f32 %v1018, %v1018
    %v1023 = vadd.f32 %v1019, %v1020
    %v1024 = vadd.f32 %v1023, %v1021
    %v1025 = vadd.f32 %v1024, %v1022
    %v1026 = vrot.slane %v1025, 4
    %v1027 = vadd.f32 %v1025, %v1026
    %v1028 = vrot.slane %v1027, 2
    %v1029 = vadd.f32 %v1027, %v1028
    %v1030 = vrot.slane %v1029, 1
    %v1031 = vadd.f32 %v1029, %v1030
    %v1032 = vmul.f32 %v1031, %v339
    %v1033 = vlaneseq
    %v1034 = vshrl.u32 %v1033, 7
    %v1035 = vsub.s32 0, %v1034
    %v1036 = vrot.slane %v898, %v1035
    %v1037 = vmul.f32 %v1036, %v1015
    %v1038 = vmul.f32 %v1036, %v1016
    %v1039 = vmul.f32 %v1036, %v1017
    %v1040 = vmul.f32 %v1036, %v1018
    %v1041 = vadd.f32 %v1032, 1e-05
    %v1042 = vrsqrt.pop %v1041
    %v1043 = vmul.f32 %v1037, %v1042
    %v1044 = vmul.f32 %v1038, %v1042
    %v1045 = vmul.f32 %v1039, %v1042
    %v1046 = vmul.f32 %v1040, %v1042
    %v1047 = vlaneseq
    %v1048 = vshrl.u32 %v1047, 7
    %v1049 = vsub.s32 0, %v1048
    %v1050 = vrot.slane %v899, %v1049
    %v1051 = vadd.f32 %v1043, %v1050
    %v1052 = vadd.f32 %v1044, %v1050
    %v1053 = vadd.f32 %v1045, %v1050
    %v1054 = vadd.f32 %v1046, %v1050
    %v1055 = vxor.u32 %v1051, 2147483648
    %v1056 = vxor.u32 %v1052, 2147483648
    %v1057 = vxor.u32 %v1053, 2147483648
    %v1058 = vxor.u32 %v1054, 2147483648
    %v1059 = vmul.f32 %v1055, 1.442695
    %v1060 = vpow.pop %v1059
    %v1061 = vmul.f32 %v1056, 1.442695
    %v1062 = vpow.pop %v1061
    %v1063 = vmul.f32 %v1057, 1.442695
    %v1064 = vpow.pop %v1063
    %v1065 = vmul.f32 %v1058, 1.442695
    %v1066 = vpow.pop %v1065
    %v1067 = vadd.f32 %v1060, 1.0
    %v1068 = vadd.f32 %v1062, 1.0
    %v1069 = vadd.f32 %v1064, 1.0
    %v1070 = vadd.f32 %v1066, 1.0
    %v1071 = vrcp.pop %v1067
    %v1072 = vmul.f32 1.0, %v1071
    %v1073 = vrcp.pop %v1068
    %v1074 = vmul.f32 1.0, %v1073
    %v1075 = vrcp.pop %v1069
    %v1076 = vmul.f32 1.0, %v1075
    %v1077 = vrcp.pop %v1070
    %v1078 = vmul.f32 1.0, %v1077
    %v1079 = vadd.f32 %v1072, %v1074
    %v1080 = vadd.f32 %v1079, %v1076
    %v1081 = vadd.f32 %v1080, %v1078
    %v1082 = vrot.slane %v1081, 4
    %v1083 = vadd.f32 %v1081, %v1082
    %v1084 = vrot.slane %v1083, 2
    %v1085 = vadd.f32 %v1083, %v1084
    %v1086 = vrot.slane %v1085, 1
    %v1087 = vadd.f32 %v1085, %v1086
    %v1088 = vmul.f32 %v1087, %v339
    %v1089 = vsub.f32 %v1072, %v1088
    %v1090 = vsub.f32 %v1074, %v1088
    %v1091 = vsub.f32 %v1076, %v1088
    %v1092 = vsub.f32 %v1078, %v1088
    %v1093 = vmul.f32 %v1089, %v1089
    %v1094 = vmul.f32 %v1090, %v1090
    %v1095 = vmul.f32 %v1091, %v1091
    %v1096 = vmul.f32 %v1092, %v1092
    %v1097 = vadd.f32 %v1093, %v1094
    %v1098 = vadd.f32 %v1097, %v1095
    %v1099 = vadd.f32 %v1098, %v1096
    %v1100 = vrot.slane %v1099, 4
    %v1101 = vadd.f32 %v1099, %v1100
    %v1102 = vrot.slane %v1101, 2
    %v1103 = vadd.f32 %v1101, %v1102
    %v1104 = vrot.slane %v1103, 1
    %v1105 = vadd.f32 %v1103, %v1104
    %v1106 = vmul.f32 %v1105, %v339
    %v1107 = vlaneseq
    %v1108 = vshrl.u32 %v1107, 7
    %v1109 = vsub.s32 0, %v1108
    %v1110 = vrot.slane %v900, %v1109
    %v1111 = vmul.f32 %v1110, %v1089
    %v1112 = vmul.f32 %v1110, %v1090
    %v1113 = vmul.f32 %v1110, %v1091
    %v1114 = vmul.f32 %v1110, %v1092
    %v1115 = vadd.f32 %v1106, 1e-05
    %v1116 = vrsqrt.pop %v1115
    %v1117 = vmul.f32 %v1111, %v1116
    %v1118 = vmul.f32 %v1112, %v1116
    %v1119 = vmul.f32 %v1113, %v1116
    %v1120 = vmul.f32 %v1114, %v1116
    %v1121 = vlaneseq
    %v1122 = vshrl.u32 %v1121, 7
    %v1123 = vsub.s32 0, %v1122
    %v1124 = vrot.slane %v901, %v1123
    %v1125 = vadd.f32 %v1117, %v1124
    %v1126 = vadd.f32 %v1118, %v1124
    %v1127 = vadd.f32 %v1119, %v1124
    %v1128 = vadd.f32 %v1120, %v1124
    %v1129 = vmax.f32 %v1125, 0.0
    %v1130 = vmax.f32 %v1126, 0.0
    %v1131 = vmax.f32 %v1127, 0.0
    %v1132 = vmax.f32 %v1128, 0.0
    %v1133 = vpack.c.bf16 %v1130, %v1129
    %v1134 = vpack.c.bf16 %v1132, %v1131
    %1135 = vst [vmem:[#allocation2 + $0x8] sm:$0xff] %v1133
    %1136 = vst [vmem:[#allocation2 + $0x18] sm:$0xff] %v1134
    %v1137 = vld [vmem:[#allocation2] sm:$0xff]
    %v1138 = vld [vmem:[#allocation2 + $0x8] sm:$0xff]
    %v1139 = vld [vmem:[#allocation2 + $0x10] sm:$0xff]
    %v1140 = vld [vmem:[#allocation2 + $0x18] sm:$0xff]
    %v1141 = vld [vmem:[#allocation13] sm:$0xf]
    %v1142 = vld [vmem:[#allocation13 + $0x4] sm:$0xf]
    %v1143 = vld [vmem:[#allocation13 + $0x8] sm:$0xf]
    %v1144 = vld [vmem:[#allocation13 + $0xc] sm:$0xf]
    %v1145 = vld [vmem:[#allocation13 + $0x10] sm:$0xf]
    %v1146 = vld [vmem:[#allocation13 + $0x14] sm:$0xf]
    %v1147 = vld [vmem:[#allocation13 + $0x18] sm:$0xf]
    %v1148 = vld [vmem:[#allocation13 + $0x1c] sm:$0xf]
    %v1149 = vld [vmem:[#allocation13 + $0x20] sm:$0xf]
    %v1150 = vld [vmem:[#allocation13 + $0x24] sm:$0xf]
    %v1151 = vld [vmem:[#allocation13 + $0x28] sm:$0xf]
    %v1152 = vld [vmem:[#allocation13 + $0x2c] sm:$0xf]
    %v1153 = vld [vmem:[#allocation13 + $0x30] sm:$0xf]
    %v1154 = vld [vmem:[#allocation13 + $0x34] sm:$0xf]
    %v1155 = vld [vmem:[#allocation13 + $0x38] sm:$0xf]
    %v1156 = vld [vmem:[#allocation13 + $0x3c] sm:$0xf]
    %v1157 = vld [vmem:[#allocation13 + $0x40] sm:$0xf]
    %v1158 = vld [vmem:[#allocation13 + $0x44] sm:$0xf]
    %v1159 = vld [vmem:[#allocation13 + $0x48] sm:$0xf]
    %v1160 = vld [vmem:[#allocation13 + $0x4c] sm:$0xf]
    %v1161 = vld [vmem:[#allocation13 + $0x50] sm:$0xf]
    %v1162 = vld [vmem:[#allocation13 + $0x54] sm:$0xf]
    %v1163 = vld [vmem:[#allocation13 + $0x58] sm:$0xf]
    %v1164 = vld [vmem:[#allocation13 + $0x5c] sm:$0xf]
    %v1165 = vld [vmem:[#allocation13 + $0x60] sm:$0xf]
    %v1166 = vld [vmem:[#allocation13 + $0x64] sm:$0xf]
    %v1167 = vld [vmem:[#allocation13 + $0x68] sm:$0xf]
    %v1168 = vld [vmem:[#allocation13 + $0x6c] sm:$0xf]
    %v1169 = vld [vmem:[#allocation13 + $0x70] sm:$0xf]
    %v1170 = vld [vmem:[#allocation13 + $0x74] sm:$0xf]
    %v1171 = vld [vmem:[#allocation13 + $0x78] sm:$0xf]
    %v1172 = vld [vmem:[#allocation13 + $0x7c] sm:$0xf]
    %v1173 = vld [vmem:[%s6] sm:$0x1]
    %v1175 = vlaneseq
    %v1176 = vshrl.u32 %v1175, 7
    %v1177 = vsub.s32 0, %v1176
    %v1178 = vrot.slane %v1173, %v1177
    %v1212 = vunpack.c.l.b16 %v1141
    %v1213 = vunpack.c.l.b16 %v1142
    %v1214 = vunpack.c.l.b16 %v1143
    %v1215 = vunpack.c.l.b16 %v1144
    %v1216 = vunpack.c.l.b16 %v1145
    %v1217 = vunpack.c.l.b16 %v1146
    %v1218 = vunpack.c.l.b16 %v1147
    %v1219 = vunpack.c.l.b16 %v1148
    %v1220 = vunpack.c.l.b16 %v1149
    %v1221 = vunpack.c.l.b16 %v1150
    %v1222 = vunpack.c.l.b16 %v1151
    %v1223 = vunpack.c.l.b16 %v1152
    %v1224 = vunpack.c.l.b16 %v1153
    %v1225 = vunpack.c.l.b16 %v1154
    %v1226 = vunpack.c.l.b16 %v1155
    %v1227 = vunpack.c.l.b16 %v1156
    %v1228 = vunpack.c.l.b16 %v1157
    %v1229 = vunpack.c.l.b16 %v1158
    %v1230 = vunpack.c.l.b16 %v1159
    %v1231 = vunpack.c.l.b16 %v1160
    %v1232 = vunpack.c.l.b16 %v1161
    %v1233 = vunpack.c.l.b16 %v1162
    %v1234 = vunpack.c.l.b16 %v1163
    %v1235 = vunpack.c.l.b16 %v1164
    %v1236 = vunpack.c.l.b16 %v1165
    %v1237 = vunpack.c.l.b16 %v1166
    %v1238 = vunpack.c.l.b16 %v1167
    %v1239 = vunpack.c.l.b16 %v1168
    %v1240 = vunpack.c.l.b16 %v1169
    %v1241 = vunpack.c.l.b16 %v1170
    %v1242 = vunpack.c.l.b16 %v1171
    %v1243 = vunpack.c.l.b16 %v1172
    %v1244 = vpack.c.b16 %v1213, %v1212
    %v1245 = vpack.c.b16 %v1215, %v1214
    %v1246 = vpack.c.b16 %v1217, %v1216
    %v1247 = vpack.c.b16 %v1219, %v1218
    %v1248 = vpack.c.b16 %v1221, %v1220
    %v1249 = vpack.c.b16 %v1223, %v1222
    %v1250 = vpack.c.b16 %v1225, %v1224
    %v1251 = vpack.c.b16 %v1227, %v1226
    %v1252 = vpack.c.b16 %v1229, %v1228
    %v1253 = vpack.c.b16 %v1231, %v1230
    %v1254 = vpack.c.b16 %v1233, %v1232
    %v1255 = vpack.c.b16 %v1235, %v1234
    %v1256 = vpack.c.b16 %v1237, %v1236
    %v1257 = vpack.c.b16 %v1239, %v1238
    %v1258 = vpack.c.b16 %v1241, %v1240
    %v1259 = vpack.c.b16 %v1243, %v1242
    %1276 = vmatprep.subr.bf16.mxu0 0
    %1277 = vmatpush1.bf16.msra.mxu0 %v1244
    %1278 = vmatprep.subr.bf16.mxu0 0
    %1279 = vmatpush1.bf16.msra.mxu0 %v1245
    %1280 = vmatprep.subr.bf16.mxu0 0
    %1281 = vmatpush1.bf16.msra.mxu0 %v1246
    %1282 = vmatprep.subr.bf16.mxu0 0
    %1283 = vmatpush1.bf16.msra.mxu0 %v1247
    %1284 = vmatprep.subr.bf16.mxu0 0
    %1285 = vmatpush1.bf16.msra.mxu0 %v1248
    %1286 = vmatprep.subr.bf16.mxu0 0
    %1287 = vmatpush1.bf16.msra.mxu0 %v1249
    %1288 = vmatprep.subr.bf16.mxu0 0
    %1289 = vmatpush1.bf16.msra.mxu0 %v1250
    %1290 = vmatprep.subr.bf16.mxu0 0
    %1291 = vmatpush1.bf16.msra.mxu0 %v1251
    %1292 = vmatprep.subr.bf16.mxu0 0
    %1293 = vmatpush1.bf16.msra.mxu0 %v1252
    %1294 = vmatprep.subr.bf16.mxu0 0
    %1295 = vmatpush1.bf16.msra.mxu0 %v1253
    %1296 = vmatprep.subr.bf16.mxu0 0
    %1297 = vmatpush1.bf16.msra.mxu0 %v1254
    %1298 = vmatprep.subr.bf16.mxu0 0
    %1299 = vmatpush1.bf16.msra.mxu0 %v1255
    %1300 = vmatprep.subr.bf16.mxu0 0
    %1301 = vmatpush1.bf16.msra.mxu0 %v1256
    %1302 = vmatprep.subr.bf16.mxu0 0
    %1303 = vmatpush1.bf16.msra.mxu0 %v1257
    %1304 = vmatprep.subr.bf16.mxu0 0
    %1305 = vmatpush1.bf16.msra.mxu0 %v1258
    %1306 = vmatprep.subr.bf16.mxu0 0
    %1307 = vmatpush1.bf16.msra.mxu0 %v1259
    %1308 = vmatprep.mubr.bf16.mxu0 %v1138
    %1309 = vmatmul.mubr.bf16.gmra.mrb[0].mxu0 %v1137
    %v1310 = vpop.f32.mrb[0].mxu0
    %v1311 = vadd.f32 %v1178, %v1310
    %v1312 = vpop.f32.mrb[0].mxu0
    %v1313 = vpop.f32.mrb[0].mxu0
    %v1314 = vadd.f32 %v1178, %v1313
    %v1315 = vpop.f32.mrb[0].mxu0
    %1316 = vmatprep.mubr.bf16.mxu0 %v1140
    %1317 = vmatmul.mubr.bf16.gmra.mrb[0].mxu0 %v1139
    %v1318 = vpop.f32.mrb[0].mxu0
    %v1319 = vadd.f32 %v1178, %v1318
    %v1320 = vpop.f32.mrb[0].mxu0
    %v1321 = vpop.f32.mrb[0].mxu0
    %v1322 = vadd.f32 %v1178, %v1321
    %v1323 = vpop.f32.mrb[0].mxu0
    %1324 = vdwg.mxu0
    %1325 = vst [vmem:[#allocation14] sm:$0xff] %v1311
    %1326 = vst [vmem:[#allocation14 + $0x8] sm:$0xff] %v1314
    %1327 = vst [vmem:[#allocation14 + $0x10] sm:$0xff] %v1319
    %1328 = vst [vmem:[#allocation14 + $0x18] sm:$0xff] %v1322
    // Predicated region
    $region54: #{tpu_custom_call.1} parent=1 // pred_check
      _
    $region55: #{tpu_custom_call.1} parent=1 // pred_check_branch
      %1330 = sbr.rel (0) target = $region57
    $region56: #{tpu_custom_call.1} parent=1 // pred_region
      %s1332 = ssub.s32 512, 512
      %1333 = vsyncadd [#allocation5], %s1332
      %s1334 = sshll.u32 [#allocation14], 4
      %s1335 = int_to_ptr.vmem [resolvable:$true] %s1334
      %1340 = dma.vmem_to_hbm [thread:$0]  %s1335, 512, %s7, [#allocation5], 128, 128, 8
    $region57: #{tpu_custom_call.1} parent=1 // pred_fallthru
      _
    // Predicated region
    $region58: #{tpu_custom_call.1} parent=1 // pred_check
      _
    $region59: #{tpu_custom_call.1} parent=1 // pred_check_branch
      %1342 = sbr.rel (0) target = $region61
    $region60: #{tpu_custom_call.1} parent=1 // pred_region
      %1343 = dma.done [#allocation5], 512
    $region61: #{tpu_custom_call.1} parent=1 // pred_fallthru
      _
    %1344 = vsyncpa [#allocation4], 1
    %1345 = vsyncpa [#allocation9], 1
    %1346 = vsyncpa [#allocation12], 1
    %1347 = vsyncpa [#allocation5], 1
    %1348 = vsyncpa [#allocation6], 1

</llo_original>
